<compile_context>
chip_gen: v7x
topology: tpu7x:2x2x1
jax: 0.10.0
libtpu: 0.0.40
codegen_flags: <defaults>
</compile_context>

<pallas_src>
import functools

import jax
import jax.numpy as jnp
from jax.experimental import pallas as pl
from jax.experimental.pallas import tpu as pltpu


def _bilateral_kernel(radius_ref, inv2sc_ref, inv2ss_ref, img_ref, out_ref,
                      wsum_ref, *, max_radius, h_valid, w_valid):
    """One (padded) image per grid step.

    radius_ref/inv2sc_ref/inv2ss_ref: SMEM scalar-prefetch arrays, shape (N,).
    img_ref/out_ref: (1, C, Hp, Wp) VMEM blocks.  wsum_ref: (Hp, Wp) VMEM scratch.
    """
    n = pl.program_id(0)
    radius = radius_ref[n]          # int32 per-image dynamic radius
    inv2sc = inv2sc_ref[n]          # 255^2 / (2 * sigma_color^2)  (pixels stay in [0,1])
    inv2ss = inv2ss_ref[n]          # 1 / (2 * sigma_space^2)

    _, C, Hp, Wp = img_ref.shape
    R = max_radius

    # Center pixels, loaded once.
    chans = [img_ref[0, c] for c in range(C)]

    row = jax.lax.broadcasted_iota(jnp.int32, (Hp, Wp), 0)
    col = jax.lax.broadcasted_iota(jnp.int32, (Hp, Wp), 1)

    # Precomputed 0/1 column-validity planes (hoisted out of the tap loop).
    colmask = {
        dx: jnp.logical_and(col + dx >= 0, col + dx < w_valid).astype(jnp.float32)
        for dx in range(-R, R + 1)
    }

    # Accumulators: weighted sums go straight into the resident f32 output block.
    wsum_ref[...] = jnp.zeros_like(wsum_ref)
    out_ref[...] = jnp.zeros_like(out_ref)

    def gate(needed, pred, body):
        # radius >= 1 always (window_length >= 3), so |d| <= 1 taps need no gate.
        if needed:
            pl.when(pred)(body)
        else:
            body()

    for dy in range(-R, R + 1):
        def dy_body(dy=dy):
            # Sublane roll once per dy (hoisted out of the dx loop).
            # roll(a, s)[i] = a[i - s]  =>  to read a[i + d] use shift (-d) % extent.
            if dy == 0:
                rowsh = chans
            else:
                rowsh = [pltpu.roll(c, shift=(-dy) % Hp, axis=0) for c in chans]
            rmask = jnp.logical_and(row + dy >= 0,
                                    row + dy < h_valid).astype(jnp.float32)

            for dx in range(-R, R + 1):
                def dx_body(dy=dy, dx=dx, rowsh=rowsh, rmask=rmask):
                    if dx == 0:
                        shifted = rowsh
                    else:
                        shifted = [pltpu.roll(c, shift=(-dx) % Wp, axis=1)
                                   for c in rowsh]

                    # Joint-channel squared color distance.
                    d2 = jnp.zeros((Hp, Wp), jnp.float32)
                    for c in range(C):
                        diff = shifted[c] - chans[c]
                        d2 = d2 + diff * diff

                    # Fused range + spatial Gaussian (single EUP exp per tap),
                    # masked with two precomputed 0/1 plane multiplies.
                    expo = d2 * inv2sc + jnp.float32(dy * dy + dx * dx) * inv2ss
                    w = jnp.exp(-expo) * (rmask * colmask[dx])

                    wsum_ref[...] += w
                    for c in range(C):
                        out_ref[0, c] += w * shifted[c]

                gate(abs(dx) > 1, radius >= abs(dx), dx_body)

        gate(abs(dy) > 1, radius >= abs(dy), dy_body)

    # Normalize over the valid taps.  For valid pixels the center tap has
    # weight 1 (wsum >= 1); the clamp only protects padded columns/rows.
    inv = pl.reciprocal(jnp.maximum(wsum_ref[...], jnp.float32(1e-6)), approx=True)
    for c in range(C):
        out_ref[0, c] = out_ref[0, c] * inv


def noise_bilateral(img, params, max_radius=None):
    """img: (N, C, H, W) float in [0, 1]; params: (N, 3) float in [0, 1]."""
    N, C, H, W = img.shape
    assert params.shape == (N, 3)

    p0 = params[:, 0].astype(jnp.int32)
    radius = p0 * 7 + 1                                   # ((int(p0)*14 + 3) - 1) // 2
    sigma_color = params[:, 1] * 99.0 + 1.0
    sigma_space = params[:, 2] * 99.0 + 1.0
    # Fold the 0..255 scaling into the color term so pixels stay in [0, 1].
    inv2sc = (255.0 * 255.0 / (2.0 * sigma_color * sigma_color)).astype(jnp.float32)
    inv2ss = (1.0 / (2.0 * sigma_space * sigma_space)).astype(jnp.float32)

    if max_radius is None:
        try:
            # Concrete params: derive the tight static unroll bound.
            max_radius = int(jax.device_get(jnp.max(radius)))
        except jax.errors.ConcretizationTypeError:
            # Traced params (under jit): static upper bound for p0 in [0, 1].
            max_radius = 8
    max_radius = max(int(max_radius), 1)

    # Lane-dense layout: pad W up to a multiple of 128 (H to 8) so every vreg
    # is fully used and output stores are unmasked; padding is masked + sliced.
    Hp = -(-H // 8) * 8
    Wp = max(128, -(-W // 128) * 128)
    imgp = img.astype(jnp.float32)
    if (Hp, Wp) != (H, W):
        imgp = jnp.pad(imgp, ((0, 0), (0, 0), (0, Hp - H), (0, Wp - W)))

    kernel = functools.partial(_bilateral_kernel, max_radius=max_radius,
                               h_valid=H, w_valid=W)

    taps = (2 * max_radius + 1) ** 2
    cost = pl.CostEstimate(
        flops=int(N * taps * Hp * Wp * (8 * C + 8)),
        transcendentals=int(N * taps * Hp * Wp),
        bytes_accessed=int(2 * N * C * Hp * Wp * 4),
    )

    out = pl.pallas_call(
        kernel,
        out_shape=jax.ShapeDtypeStruct((N, C, Hp, Wp), jnp.float32),
        grid_spec=pltpu.PrefetchScalarGridSpec(
            num_scalar_prefetch=3,
            grid=(N,),
            in_specs=[
                pl.BlockSpec((1, C, Hp, Wp), lambda n, r, sc, ss: (n, 0, 0, 0)),
            ],
            out_specs=pl.BlockSpec((1, C, Hp, Wp),
                                   lambda n, r, sc, ss: (n, 0, 0, 0)),
            scratch_shapes=[pltpu.VMEM((Hp, Wp), jnp.float32)],
        ),
        compiler_params=pltpu.CompilerParams(
            dimension_semantics=("parallel",)),
        cost_estimate=cost,
    )(radius, inv2sc, inv2ss, imgp)

    return out[:, :, :H, :W]


def _reference(img, params):
    """Pure-JAX reference of the same bilateral filter (0..255 domain)."""
    N, C, H, W = img.shape
    p0 = params[:, 0].astype(jnp.int32)
    radius = p0 * 7 + 1
    sigma_color = params[:, 1] * 99.0 + 1.0
    sigma_space = params[:, 2] * 99.0 + 1.0
    inv2sc = 1.0 / (2.0 * sigma_color * sigma_color)
    inv2ss = 1.0 / (2.0 * sigma_space * sigma_space)

    x = img.astype(jnp.float32) * 255.0
    R = int(jax.device_get(jnp.max(radius)))
    row = jnp.arange(H)[:, None]
    col = jnp.arange(W)[None, :]

    outs = []
    for i in range(N):
        xc = x[i]                                         # (C, H, W)
        wsum = jnp.zeros((H, W), jnp.float32)
        acc = jnp.zeros((C, H, W), jnp.float32)
        for dy in range(-R, R + 1):
            for dx in range(-R, R + 1):
                shifted = jnp.roll(xc, shift=(-dy, -dx), axis=(1, 2))
                d2 = jnp.sum((shifted - xc) ** 2, axis=0)
                w = jnp.exp(-(d2 * inv2sc[i] + (dy * dy + dx * dx) * inv2ss[i]))
                inb = ((row + dy >= 0) & (row + dy < H) &
                       (col + dx >= 0) & (col + dx < W))
                rad_ok = (radius[i] >= abs(dy)) & (radius[i] >= abs(dx))
                w = jnp.where(inb & rad_ok, w, 0.0)
                wsum = wsum + w
                acc = acc + w[None] * shifted
        outs.append(acc / wsum[None] / 255.0)
    return jnp.stack(outs).astype(jnp.float32)


if __name__ == "__main__":
    key = jax.random.PRNGKey(0)
    k_img, k_par = jax.random.split(key)

    N, C, H, W = 2, 3, 16, 16
    img = jax.random.uniform(k_img, (N, C, H, W), jnp.float32)      # [0, 1)
    params = jax.random.uniform(k_par, (N, 3), jnp.float32)          # [0, 1)

    ref = _reference(img, params)

    # Tight static radius derived from concrete params.
    out = jax.block_until_ready(noise_bilateral(img, params))
    assert out.shape == (N, C, H, W)
    assert jnp.allclose(out, ref, atol=2e-3, rtol=2e-3), "mismatch vs reference"

    # Oversized static bound: taps beyond each image's dynamic radius must be
    # skipped by the pl.when gates, giving the same result.
    out2 = jax.block_until_ready(noise_bilateral(img, params, max_radius=2))
    assert jnp.allclose(out2, ref, atol=2e-3, rtol=2e-3), "dynamic-radius gating mismatch"

    print("KERNEL_OK")
</pallas_src>

<mosaic_0001>
module attributes {stable_mosaic.version = 11 : i64} {
  func.func @_bilateral_kernel(%arg0: i32, %arg1: memref<2xi32, #tpu.memory_space<smem>>, %arg2: memref<2xf32, #tpu.memory_space<smem>>, %arg3: memref<2xf32, #tpu.memory_space<smem>>, %arg4: memref<1x3x16x128xf32, #tpu.memory_space<vmem>>, %arg5: memref<1x3x16x128xf32, #tpu.memory_space<vmem>>, %arg6: memref<16x128xf32, #tpu.memory_space<vmem>>) attributes {dimension_semantics = [#tpu.dimension_semantics<parallel>], iteration_bounds = array<i64: 2>, scalar_prefetch = 3 : i64, scratch_operands = 1 : i64, tpu.core_type = #tpu.core_type<tc>, window_params = [{transform_indices = @transform_0, window_bounds = array<i64: 1, 3, 16, 128>}, {transform_indices = @transform_1, window_bounds = array<i64: 1, 3, 16, 128>}]} {
    %0 = arith.index_cast %arg0 : i32 to index
    %1 = memref.load %arg2[%0] : memref<2xf32, #tpu.memory_space<smem>>
    %2 = arith.index_cast %arg0 : i32 to index
    %3 = memref.load %arg3[%2] : memref<2xf32, #tpu.memory_space<smem>>
    %c0 = arith.constant 0 : index
    %c0_0 = arith.constant 0 : index
    %c0_1 = arith.constant 0 : index
    %c0_2 = arith.constant 0 : index
    %4 = vector.load %arg4[%c0, %c0_0, %c0_1, %c0_2] : memref<1x3x16x128xf32, #tpu.memory_space<vmem>>, vector<1x1x16x128xf32>
    %5 = vector.shape_cast %4 : vector<1x1x16x128xf32> to vector<16x128xf32>
    %c0_3 = arith.constant 0 : index
    %c1 = arith.constant 1 : index
    %c0_4 = arith.constant 0 : index
    %c0_5 = arith.constant 0 : index
    %6 = vector.load %arg4[%c0_3, %c1, %c0_4, %c0_5] : memref<1x3x16x128xf32, #tpu.memory_space<vmem>>, vector<1x1x16x128xf32>
    %7 = vector.shape_cast %6 : vector<1x1x16x128xf32> to vector<16x128xf32>
    %c0_6 = arith.constant 0 : index
    %c2 = arith.constant 2 : index
    %c0_7 = arith.constant 0 : index
    %c0_8 = arith.constant 0 : index
    %8 = vector.load %arg4[%c0_6, %c2, %c0_7, %c0_8] : memref<1x3x16x128xf32, #tpu.memory_space<vmem>>, vector<1x1x16x128xf32>
    %9 = vector.shape_cast %8 : vector<1x1x16x128xf32> to vector<16x128xf32>
    %10 = tpu.iota {dimensions = array<i32: 0>} : vector<16x128xi32>
    %11 = tpu.iota {dimensions = array<i32: 1>} : vector<16x128xi32>
    %c-1_i32 = arith.constant -1 : i32
    %12 = vector.broadcast %c-1_i32 : i32 to vector<16x128xi32>
    %13 = arith.addi %11, %12 : vector<16x128xi32>
    %c0_i32 = arith.constant 0 : i32
    %14 = vector.broadcast %c0_i32 : i32 to vector<16x128xi32>
    %15 = arith.cmpi sge, %13, %14 : vector<16x128xi32>
    %c-1_i32_9 = arith.constant -1 : i32
    %16 = vector.broadcast %c-1_i32_9 : i32 to vector<16x128xi32>
    %17 = arith.addi %11, %16 : vector<16x128xi32>
    %c16_i32 = arith.constant 16 : i32
    %18 = vector.broadcast %c16_i32 : i32 to vector<16x128xi32>
    %19 = arith.cmpi slt, %17, %18 : vector<16x128xi32>
    %20 = arith.andi %15, %19 : vector<16x128xi1>
    %21 = arith.extui %20 : vector<16x128xi1> to vector<16x128xi32>
    %22 = arith.sitofp %21 : vector<16x128xi32> to vector<16x128xf32>
    %c0_i32_10 = arith.constant 0 : i32
    %23 = vector.broadcast %c0_i32_10 : i32 to vector<16x128xi32>
    %24 = arith.addi %11, %23 : vector<16x128xi32>
    %c0_i32_11 = arith.constant 0 : i32
    %25 = vector.broadcast %c0_i32_11 : i32 to vector<16x128xi32>
    %26 = arith.cmpi sge, %24, %25 : vector<16x128xi32>
    %c0_i32_12 = arith.constant 0 : i32
    %27 = vector.broadcast %c0_i32_12 : i32 to vector<16x128xi32>
    %28 = arith.addi %11, %27 : vector<16x128xi32>
    %c16_i32_13 = arith.constant 16 : i32
    %29 = vector.broadcast %c16_i32_13 : i32 to vector<16x128xi32>
    %30 = arith.cmpi slt, %28, %29 : vector<16x128xi32>
    %31 = arith.andi %26, %30 : vector<16x128xi1>
    %32 = arith.extui %31 : vector<16x128xi1> to vector<16x128xi32>
    %33 = arith.sitofp %32 : vector<16x128xi32> to vector<16x128xf32>
    %c1_i32 = arith.constant 1 : i32
    %34 = vector.broadcast %c1_i32 : i32 to vector<16x128xi32>
    %35 = arith.addi %11, %34 : vector<16x128xi32>
    %c0_i32_14 = arith.constant 0 : i32
    %36 = vector.broadcast %c0_i32_14 : i32 to vector<16x128xi32>
    %37 = arith.cmpi sge, %35, %36 : vector<16x128xi32>
    %c1_i32_15 = arith.constant 1 : i32
    %38 = vector.broadcast %c1_i32_15 : i32 to vector<16x128xi32>
    %39 = arith.addi %11, %38 : vector<16x128xi32>
    %c16_i32_16 = arith.constant 16 : i32
    %40 = vector.broadcast %c16_i32_16 : i32 to vector<16x128xi32>
    %41 = arith.cmpi slt, %39, %40 : vector<16x128xi32>
    %42 = arith.andi %37, %41 : vector<16x128xi1>
    %43 = arith.extui %42 : vector<16x128xi1> to vector<16x128xi32>
    %44 = arith.sitofp %43 : vector<16x128xi32> to vector<16x128xf32>
    %cst = arith.constant 0.000000e+00 : f32
    %45 = vector.broadcast %cst : f32 to vector<16x128xf32>
    %c0_17 = arith.constant 0 : index
    %c0_18 = arith.constant 0 : index
    %46 = vector.load %arg6[%c0_17, %c0_18] : memref<16x128xf32, #tpu.memory_space<vmem>>, vector<16x128xf32>
    tpu.vector_store %arg6[%c0_17, %c0_18], %45 {strides = array<i32>} : memref<16x128xf32, #tpu.memory_space<vmem>>, vector<16x128xf32>,
    %cst_19 = arith.constant 0.000000e+00 : f32
    %47 = vector.broadcast %cst_19 : f32 to vector<1x3x16x128xf32>
    %c0_20 = arith.constant 0 : index
    %c0_21 = arith.constant 0 : index
    %c0_22 = arith.constant 0 : index
    %c0_23 = arith.constant 0 : index
    %48 = vector.load %arg5[%c0_20, %c0_21, %c0_22, %c0_23] : memref<1x3x16x128xf32, #tpu.memory_space<vmem>>, vector<1x3x16x128xf32>
    tpu.vector_store %arg5[%c0_20, %c0_21, %c0_22, %c0_23], %47 {strides = array<i32>} : memref<1x3x16x128xf32, #tpu.memory_space<vmem>>, vector<1x3x16x128xf32>,
    %c1_i32_24 = arith.constant 1 : i32
    %49 = tpu.dynamic_rotate %5 by %c1_i32_24 dim 0 : vector<16x128xf32>, i32 -> vector<16x128xf32>
    %c1_i32_25 = arith.constant 1 : i32
    %50 = tpu.dynamic_rotate %7 by %c1_i32_25 dim 0 : vector<16x128xf32>, i32 -> vector<16x128xf32>
    %c1_i32_26 = arith.constant 1 : i32
    %51 = tpu.dynamic_rotate %9 by %c1_i32_26 dim 0 : vector<16x128xf32>, i32 -> vector<16x128xf32>
    %c-1_i32_27 = arith.constant -1 : i32
    %52 = vector.broadcast %c-1_i32_27 : i32 to vector<16x128xi32>
    %53 = arith.addi %10, %52 : vector<16x128xi32>
    %c0_i32_28 = arith.constant 0 : i32
    %54 = vector.broadcast %c0_i32_28 : i32 to vector<16x128xi32>
    %55 = arith.cmpi sge, %53, %54 : vector<16x128xi32>
    %c-1_i32_29 = arith.constant -1 : i32
    %56 = vector.broadcast %c-1_i32_29 : i32 to vector<16x128xi32>
    %57 = arith.addi %10, %56 : vector<16x128xi32>
    %c16_i32_30 = arith.constant 16 : i32
    %58 = vector.broadcast %c16_i32_30 : i32 to vector<16x128xi32>
    %59 = arith.cmpi slt, %57, %58 : vector<16x128xi32>
    %60 = arith.andi %55, %59 : vector<16x128xi1>
    %61 = arith.extui %60 : vector<16x128xi1> to vector<16x128xi32>
    %62 = arith.sitofp %61 : vector<16x128xi32> to vector<16x128xf32>
    %c1_i32_31 = arith.constant 1 : i32
    %63 = tpu.dynamic_rotate %49 by %c1_i32_31 dim 1 : vector<16x128xf32>, i32 -> vector<16x128xf32>
    %c1_i32_32 = arith.constant 1 : i32
    %64 = tpu.dynamic_rotate %50 by %c1_i32_32 dim 1 : vector<16x128xf32>, i32 -> vector<16x128xf32>
    %c1_i32_33 = arith.constant 1 : i32
    %65 = tpu.dynamic_rotate %51 by %c1_i32_33 dim 1 : vector<16x128xf32>, i32 -> vector<16x128xf32>
    %cst_34 = arith.constant 0.000000e+00 : f32
    %66 = vector.broadcast %cst_34 : f32 to vector<16x128xf32>
    %67 = arith.subf %63, %5 : vector<16x128xf32>
    %68 = arith.mulf %67, %67 : vector<16x128xf32>
    %69 = arith.addf %66, %68 : vector<16x128xf32>
    %70 = arith.subf %64, %7 : vector<16x128xf32>
    %71 = arith.mulf %70, %70 : vector<16x128xf32>
    %72 = arith.addf %69, %71 : vector<16x128xf32>
    %73 = arith.subf %65, %9 : vector<16x128xf32>
    %74 = arith.mulf %73, %73 : vector<16x128xf32>
    %75 = arith.addf %72, %74 : vector<16x128xf32>
    %76 = vector.broadcast %1 : f32 to vector<16x128xf32>
    %77 = arith.mulf %75, %76 : vector<16x128xf32>
    %cst_35 = arith.constant 2.000000e+00 : f32
    %78 = arith.mulf %cst_35, %3 : f32
    %79 = vector.broadcast %78 : f32 to vector<16x128xf32>
    %80 = arith.addf %77, %79 : vector<16x128xf32>
    %cst_36 = arith.constant 0.000000e+00 : f32
    %81 = vector.broadcast %cst_36 : f32 to vector<16x128xf32>
    %82 = arith.subf %81, %80 : vector<16x128xf32>
    %83 = math.exp %82 : vector<16x128xf32>
    %84 = arith.mulf %62, %22 : vector<16x128xf32>
    %85 = arith.mulf %83, %84 : vector<16x128xf32>
    %c0_37 = arith.constant 0 : index
    %c0_38 = arith.constant 0 : index
    %86 = vector.load %arg6[%c0_37, %c0_38] : memref<16x128xf32, #tpu.memory_space<vmem>>, vector<16x128xf32>
    %87 = arith.addf %86, %85 : vector<16x128xf32>
    %c0_39 = arith.constant 0 : index
    %c0_40 = arith.constant 0 : index
    %88 = vector.load %arg6[%c0_39, %c0_40] : memref<16x128xf32, #tpu.memory_space<vmem>>, vector<16x128xf32>
    tpu.vector_store %arg6[%c0_39, %c0_40], %87 {strides = array<i32>} : memref<16x128xf32, #tpu.memory_space<vmem>>, vector<16x128xf32>,
    %c0_41 = arith.constant 0 : index
    %c0_42 = arith.constant 0 : index
    %c0_43 = arith.constant 0 : index
    %c0_44 = arith.constant 0 : index
    %89 = vector.load %arg5[%c0_41, %c0_42, %c0_43, %c0_44] : memref<1x3x16x128xf32, #tpu.memory_space<vmem>>, vector<1x1x16x128xf32>
    %90 = vector.shape_cast %89 : vector<1x1x16x128xf32> to vector<16x128xf32>
    %91 = arith.mulf %85, %63 : vector<16x128xf32>
    %92 = arith.addf %90, %91 : vector<16x128xf32>
    %c0_45 = arith.constant 0 : index
    %c0_46 = arith.constant 0 : index
    %c0_47 = arith.constant 0 : index
    %c0_48 = arith.constant 0 : index
    %93 = vector.load %arg5[%c0_45, %c0_46, %c0_47, %c0_48] : memref<1x3x16x128xf32, #tpu.memory_space<vmem>>, vector<1x1x16x128xf32>
    %94 = vector.shape_cast %93 : vector<1x1x16x128xf32> to vector<16x128xf32>
    %95 = vector.shape_cast %92 : vector<16x128xf32> to vector<1x1x16x128xf32>
    tpu.vector_store %arg5[%c0_45, %c0_46, %c0_47, %c0_48], %95 {strides = array<i32>} : memref<1x3x16x128xf32, #tpu.memory_space<vmem>>, vector<1x1x16x128xf32>,
    %c0_49 = arith.constant 0 : index
    %c1_50 = arith.constant 1 : index
    %c0_51 = arith.constant 0 : index
    %c0_52 = arith.constant 0 : index
    %96 = vector.load %arg5[%c0_49, %c1_50, %c0_51, %c0_52] : memref<1x3x16x128xf32, #tpu.memory_space<vmem>>, vector<1x1x16x128xf32>
    %97 = vector.shape_cast %96 : vector<1x1x16x128xf32> to vector<16x128xf32>
    %98 = arith.mulf %85, %64 : vector<16x128xf32>
    %99 = arith.addf %97, %98 : vector<16x128xf32>
    %c0_53 = arith.constant 0 : index
    %c1_54 = arith.constant 1 : index
    %c0_55 = arith.constant 0 : index
    %c0_56 = arith.constant 0 : index
    %100 = vector.load %arg5[%c0_53, %c1_54, %c0_55, %c0_56] : memref<1x3x16x128xf32, #tpu.memory_space<vmem>>, vector<1x1x16x128xf32>
    %101 = vector.shape_cast %100 : vector<1x1x16x128xf32> to vector<16x128xf32>
    %102 = vector.shape_cast %99 : vector<16x128xf32> to vector<1x1x16x128xf32>
    tpu.vector_store %arg5[%c0_53, %c1_54, %c0_55, %c0_56], %102 {strides = array<i32>} : memref<1x3x16x128xf32, #tpu.memory_space<vmem>>, vector<1x1x16x128xf32>,
    %c0_57 = arith.constant 0 : index
    %c2_58 = arith.constant 2 : index
    %c0_59 = arith.constant 0 : index
    %c0_60 = arith.constant 0 : index
    %103 = vector.load %arg5[%c0_57, %c2_58, %c0_59, %c0_60] : memref<1x3x16x128xf32, #tpu.memory_space<vmem>>, vector<1x1x16x128xf32>
    %104 = vector.shape_cast %103 : vector<1x1x16x128xf32> to vector<16x128xf32>
    %105 = arith.mulf %85, %65 : vector<16x128xf32>
    %106 = arith.addf %104, %105 : vector<16x128xf32>
    %c0_61 = arith.constant 0 : index
    %c2_62 = arith.constant 2 : index
    %c0_63 = arith.constant 0 : index
    %c0_64 = arith.constant 0 : index
    %107 = vector.load %arg5[%c0_61, %c2_62, %c0_63, %c0_64] : memref<1x3x16x128xf32, #tpu.memory_space<vmem>>, vector<1x1x16x128xf32>
    %108 = vector.shape_cast %107 : vector<1x1x16x128xf32> to vector<16x128xf32>
    %109 = vector.shape_cast %106 : vector<16x128xf32> to vector<1x1x16x128xf32>
    tpu.vector_store %arg5[%c0_61, %c2_62, %c0_63, %c0_64], %109 {strides = array<i32>} : memref<1x3x16x128xf32, #tpu.memory_space<vmem>>, vector<1x1x16x128xf32>,
    %cst_65 = arith.constant 0.000000e+00 : f32
    %110 = vector.broadcast %cst_65 : f32 to vector<16x128xf32>
    %111 = arith.subf %49, %5 : vector<16x128xf32>
    %112 = arith.mulf %111, %111 : vector<16x128xf32>
    %113 = arith.addf %110, %112 : vector<16x128xf32>
    %114 = arith.subf %50, %7 : vector<16x128xf32>
    %115 = arith.mulf %114, %114 : vector<16x128xf32>
    %116 = arith.addf %113, %115 : vector<16x128xf32>
    %117 = arith.subf %51, %9 : vector<16x128xf32>
    %118 = arith.mulf %117, %117 : vector<16x128xf32>
    %119 = arith.addf %116, %118 : vector<16x128xf32>
    %120 = vector.broadcast %1 : f32 to vector<16x128xf32>
    %121 = arith.mulf %119, %120 : vector<16x128xf32>
    %cst_66 = arith.constant 1.000000e+00 : f32
    %122 = arith.mulf %cst_66, %3 : f32
    %123 = vector.broadcast %122 : f32 to vector<16x128xf32>
    %124 = arith.addf %121, %123 : vector<16x128xf32>
    %cst_67 = arith.constant 0.000000e+00 : f32
    %125 = vector.broadcast %cst_67 : f32 to vector<16x128xf32>
    %126 = arith.subf %125, %124 : vector<16x128xf32>
    %127 = math.exp %126 : vector<16x128xf32>
    %128 = arith.mulf %62, %33 : vector<16x128xf32>
    %129 = arith.mulf %127, %128 : vector<16x128xf32>
    %c0_68 = arith.constant 0 : index
    %c0_69 = arith.constant 0 : index
    %130 = vector.load %arg6[%c0_68, %c0_69] : memref<16x128xf32, #tpu.memory_space<vmem>>, vector<16x128xf32>
    %131 = arith.addf %130, %129 : vector<16x128xf32>
    %c0_70 = arith.constant 0 : index
    %c0_71 = arith.constant 0 : index
    %132 = vector.load %arg6[%c0_70, %c0_71] : memref<16x128xf32, #tpu.memory_space<vmem>>, vector<16x128xf32>
    tpu.vector_store %arg6[%c0_70, %c0_71], %131 {strides = array<i32>} : memref<16x128xf32, #tpu.memory_space<vmem>>, vector<16x128xf32>,
    %c0_72 = arith.constant 0 : index
    %c0_73 = arith.constant 0 : index
    %c0_74 = arith.constant 0 : index
    %c0_75 = arith.constant 0 : index
    %133 = vector.load %arg5[%c0_72, %c0_73, %c0_74, %c0_75] : memref<1x3x16x128xf32, #tpu.memory_space<vmem>>, vector<1x1x16x128xf32>
    %134 = vector.shape_cast %133 : vector<1x1x16x128xf32> to vector<16x128xf32>
    %135 = arith.mulf %129, %49 : vector<16x128xf32>
    %136 = arith.addf %134, %135 : vector<16x128xf32>
    %c0_76 = arith.constant 0 : index
    %c0_77 = arith.constant 0 : index
    %c0_78 = arith.constant 0 : index
    %c0_79 = arith.constant 0 : index
    %137 = vector.load %arg5[%c0_76, %c0_77, %c0_78, %c0_79] : memref<1x3x16x128xf32, #tpu.memory_space<vmem>>, vector<1x1x16x128xf32>
    %138 = vector.shape_cast %137 : vector<1x1x16x128xf32> to vector<16x128xf32>
    %139 = vector.shape_cast %136 : vector<16x128xf32> to vector<1x1x16x128xf32>
    tpu.vector_store %arg5[%c0_76, %c0_77, %c0_78, %c0_79], %139 {strides = array<i32>} : memref<1x3x16x128xf32, #tpu.memory_space<vmem>>, vector<1x1x16x128xf32>,
    %c0_80 = arith.constant 0 : index
    %c1_81 = arith.constant 1 : index
    %c0_82 = arith.constant 0 : index
    %c0_83 = arith.constant 0 : index
    %140 = vector.load %arg5[%c0_80, %c1_81, %c0_82, %c0_83] : memref<1x3x16x128xf32, #tpu.memory_space<vmem>>, vector<1x1x16x128xf32>
    %141 = vector.shape_cast %140 : vector<1x1x16x128xf32> to vector<16x128xf32>
    %142 = arith.mulf %129, %50 : vector<16x128xf32>
    %143 = arith.addf %141, %142 : vector<16x128xf32>
    %c0_84 = arith.constant 0 : index
    %c1_85 = arith.constant 1 : index
    %c0_86 = arith.constant 0 : index
    %c0_87 = arith.constant 0 : index
    %144 = vector.load %arg5[%c0_84, %c1_85, %c0_86, %c0_87] : memref<1x3x16x128xf32, #tpu.memory_space<vmem>>, vector<1x1x16x128xf32>
    %145 = vector.shape_cast %144 : vector<1x1x16x128xf32> to vector<16x128xf32>
    %146 = vector.shape_cast %143 : vector<16x128xf32> to vector<1x1x16x128xf32>
    tpu.vector_store %arg5[%c0_84, %c1_85, %c0_86, %c0_87], %146 {strides = array<i32>} : memref<1x3x16x128xf32, #tpu.memory_space<vmem>>, vector<1x1x16x128xf32>,
    %c0_88 = arith.constant 0 : index
    %c2_89 = arith.constant 2 : index
    %c0_90 = arith.constant 0 : index
    %c0_91 = arith.constant 0 : index
    %147 = vector.load %arg5[%c0_88, %c2_89, %c0_90, %c0_91] : memref<1x3x16x128xf32, #tpu.memory_space<vmem>>, vector<1x1x16x128xf32>
    %148 = vector.shape_cast %147 : vector<1x1x16x128xf32> to vector<16x128xf32>
    %149 = arith.mulf %129, %51 : vector<16x128xf32>
    %150 = arith.addf %148, %149 : vector<16x128xf32>
    %c0_92 = arith.constant 0 : index
    %c2_93 = arith.constant 2 : index
    %c0_94 = arith.constant 0 : index
    %c0_95 = arith.constant 0 : index
    %151 = vector.load %arg5[%c0_92, %c2_93, %c0_94, %c0_95] : memref<1x3x16x128xf32, #tpu.memory_space<vmem>>, vector<1x1x16x128xf32>
    %152 = vector.shape_cast %151 : vector<1x1x16x128xf32> to vector<16x128xf32>
    %153 = vector.shape_cast %150 : vector<16x128xf32> to vector<1x1x16x128xf32>
    tpu.vector_store %arg5[%c0_92, %c2_93, %c0_94, %c0_95], %153 {strides = array<i32>} : memref<1x3x16x128xf32, #tpu.memory_space<vmem>>, vector<1x1x16x128xf32>,
    %c127_i32 = arith.constant 127 : i32
    %154 = tpu.dynamic_rotate %49 by %c127_i32 dim 1 : vector<16x128xf32>, i32 -> vector<16x128xf32>
    %c127_i32_96 = arith.constant 127 : i32
    %155 = tpu.dynamic_rotate %50 by %c127_i32_96 dim 1 : vector<16x128xf32>, i32 -> vector<16x128xf32>
    %c127_i32_97 = arith.constant 127 : i32
    %156 = tpu.dynamic_rotate %51 by %c127_i32_97 dim 1 : vector<16x128xf32>, i32 -> vector<16x128xf32>
    %cst_98 = arith.constant 0.000000e+00 : f32
    %157 = vector.broadcast %cst_98 : f32 to vector<16x128xf32>
    %158 = arith.subf %154, %5 : vector<16x128xf32>
    %159 = arith.mulf %158, %158 : vector<16x128xf32>
    %160 = arith.addf %157, %159 : vector<16x128xf32>
    %161 = arith.subf %155, %7 : vector<16x128xf32>
    %162 = arith.mulf %161, %161 : vector<16x128xf32>
    %163 = arith.addf %160, %162 : vector<16x128xf32>
    %164 = arith.subf %156, %9 : vector<16x128xf32>
    %165 = arith.mulf %164, %164 : vector<16x128xf32>
    %166 = arith.addf %163, %165 : vector<16x128xf32>
    %167 = vector.broadcast %1 : f32 to vector<16x128xf32>
    %168 = arith.mulf %166, %167 : vector<16x128xf32>
    %cst_99 = arith.constant 2.000000e+00 : f32
    %169 = arith.mulf %cst_99, %3 : f32
    %170 = vector.broadcast %169 : f32 to vector<16x128xf32>
    %171 = arith.addf %168, %170 : vector<16x128xf32>
    %cst_100 = arith.constant 0.000000e+00 : f32
    %172 = vector.broadcast %cst_100 : f32 to vector<16x128xf32>
    %173 = arith.subf %172, %171 : vector<16x128xf32>
    %174 = math.exp %173 : vector<16x128xf32>
    %175 = arith.mulf %62, %44 : vector<16x128xf32>
    %176 = arith.mulf %174, %175 : vector<16x128xf32>
    %c0_101 = arith.constant 0 : index
    %c0_102 = arith.constant 0 : index
    %177 = vector.load %arg6[%c0_101, %c0_102] : memref<16x128xf32, #tpu.memory_space<vmem>>, vector<16x128xf32>
    %178 = arith.addf %177, %176 : vector<16x128xf32>
    %c0_103 = arith.constant 0 : index
    %c0_104 = arith.constant 0 : index
    %179 = vector.load %arg6[%c0_103, %c0_104] : memref<16x128xf32, #tpu.memory_space<vmem>>, vector<16x128xf32>
    tpu.vector_store %arg6[%c0_103, %c0_104], %178 {strides = array<i32>} : memref<16x128xf32, #tpu.memory_space<vmem>>, vector<16x128xf32>,
    %c0_105 = arith.constant 0 : index
    %c0_106 = arith.constant 0 : index
    %c0_107 = arith.constant 0 : index
    %c0_108 = arith.constant 0 : index
    %180 = vector.load %arg5[%c0_105, %c0_106, %c0_107, %c0_108] : memref<1x3x16x128xf32, #tpu.memory_space<vmem>>, vector<1x1x16x128xf32>
    %181 = vector.shape_cast %180 : vector<1x1x16x128xf32> to vector<16x128xf32>
    %182 = arith.mulf %176, %154 : vector<16x128xf32>
    %183 = arith.addf %181, %182 : vector<16x128xf32>
    %c0_109 = arith.constant 0 : index
    %c0_110 = arith.constant 0 : index
    %c0_111 = arith.constant 0 : index
    %c0_112 = arith.constant 0 : index
    %184 = vector.load %arg5[%c0_109, %c0_110, %c0_111, %c0_112] : memref<1x3x16x128xf32, #tpu.memory_space<vmem>>, vector<1x1x16x128xf32>
    %185 = vector.shape_cast %184 : vector<1x1x16x128xf32> to vector<16x128xf32>
    %186 = vector.shape_cast %183 : vector<16x128xf32> to vector<1x1x16x128xf32>
    tpu.vector_store %arg5[%c0_109, %c0_110, %c0_111, %c0_112], %186 {strides = array<i32>} : memref<1x3x16x128xf32, #tpu.memory_space<vmem>>, vector<1x1x16x128xf32>,
    %c0_113 = arith.constant 0 : index
    %c1_114 = arith.constant 1 : index
    %c0_115 = arith.constant 0 : index
    %c0_116 = arith.constant 0 : index
    %187 = vector.load %arg5[%c0_113, %c1_114, %c0_115, %c0_116] : memref<1x3x16x128xf32, #tpu.memory_space<vmem>>, vector<1x1x16x128xf32>
    %188 = vector.shape_cast %187 : vector<1x1x16x128xf32> to vector<16x128xf32>
    %189 = arith.mulf %176, %155 : vector<16x128xf32>
    %190 = arith.addf %188, %189 : vector<16x128xf32>
    %c0_117 = arith.constant 0 : index
    %c1_118 = arith.constant 1 : index
    %c0_119 = arith.constant 0 : index
    %c0_120 = arith.constant 0 : index
    %191 = vector.load %arg5[%c0_117, %c1_118, %c0_119, %c0_120] : memref<1x3x16x128xf32, #tpu.memory_space<vmem>>, vector<1x1x16x128xf32>
    %192 = vector.shape_cast %191 : vector<1x1x16x128xf32> to vector<16x128xf32>
    %193 = vector.shape_cast %190 : vector<16x128xf32> to vector<1x1x16x128xf32>
    tpu.vector_store %arg5[%c0_117, %c1_118, %c0_119, %c0_120], %193 {strides = array<i32>} : memref<1x3x16x128xf32, #tpu.memory_space<vmem>>, vector<1x1x16x128xf32>,
    %c0_121 = arith.constant 0 : index
    %c2_122 = arith.constant 2 : index
    %c0_123 = arith.constant 0 : index
    %c0_124 = arith.constant 0 : index
    %194 = vector.load %arg5[%c0_121, %c2_122, %c0_123, %c0_124] : memref<1x3x16x128xf32, #tpu.memory_space<vmem>>, vector<1x1x16x128xf32>
    %195 = vector.shape_cast %194 : vector<1x1x16x128xf32> to vector<16x128xf32>
    %196 = arith.mulf %176, %156 : vector<16x128xf32>
    %197 = arith.addf %195, %196 : vector<16x128xf32>
    %c0_125 = arith.constant 0 : index
    %c2_126 = arith.constant 2 : index
    %c0_127 = arith.constant 0 : index
    %c0_128 = arith.constant 0 : index
    %198 = vector.load %arg5[%c0_125, %c2_126, %c0_127, %c0_128] : memref<1x3x16x128xf32, #tpu.memory_space<vmem>>, vector<1x1x16x128xf32>
    %199 = vector.shape_cast %198 : vector<1x1x16x128xf32> to vector<16x128xf32>
    %200 = vector.shape_cast %197 : vector<16x128xf32> to vector<1x1x16x128xf32>
    tpu.vector_store %arg5[%c0_125, %c2_126, %c0_127, %c0_128], %200 {strides = array<i32>} : memref<1x3x16x128xf32, #tpu.memory_space<vmem>>, vector<1x1x16x128xf32>,
    %c0_i32_129 = arith.constant 0 : i32
    %201 = vector.broadcast %c0_i32_129 : i32 to vector<16x128xi32>
    %202 = arith.addi %10, %201 : vector<16x128xi32>
    %c0_i32_130 = arith.constant 0 : i32
    %203 = vector.broadcast %c0_i32_130 : i32 to vector<16x128xi32>
    %204 = arith.cmpi sge, %202, %203 : vector<16x128xi32>
    %c0_i32_131 = arith.constant 0 : i32
    %205 = vector.broadcast %c0_i32_131 : i32 to vector<16x128xi32>
    %206 = arith.addi %10, %205 : vector<16x128xi32>
    %c16_i32_132 = arith.constant 16 : i32
    %207 = vector.broadcast %c16_i32_132 : i32 to vector<16x128xi32>
    %208 = arith.cmpi slt, %206, %207 : vector<16x128xi32>
    %209 = arith.andi %204, %208 : vector<16x128xi1>
    %210 = arith.extui %209 : vector<16x128xi1> to vector<16x128xi32>
    %211 = arith.sitofp %210 : vector<16x128xi32> to vector<16x128xf32>
    %c1_i32_133 = arith.constant 1 : i32
    %212 = tpu.dynamic_rotate %5 by %c1_i32_133 dim 1 : vector<16x128xf32>, i32 -> vector<16x128xf32>
    %c1_i32_134 = arith.constant 1 : i32
    %213 = tpu.dynamic_rotate %7 by %c1_i32_134 dim 1 : vector<16x128xf32>, i32 -> vector<16x128xf32>
    %c1_i32_135 = arith.constant 1 : i32
    %214 = tpu.dynamic_rotate %9 by %c1_i32_135 dim 1 : vector<16x128xf32>, i32 -> vector<16x128xf32>
    %cst_136 = arith.constant 0.000000e+00 : f32
    %215 = vector.broadcast %cst_136 : f32 to vector<16x128xf32>
    %216 = arith.subf %212, %5 : vector<16x128xf32>
    %217 = arith.mulf %216, %216 : vector<16x128xf32>
    %218 = arith.addf %215, %217 : vector<16x128xf32>
    %219 = arith.subf %213, %7 : vector<16x128xf32>
    %220 = arith.mulf %219, %219 : vector<16x128xf32>
    %221 = arith.addf %218, %220 : vector<16x128xf32>
    %222 = arith.subf %214, %9 : vector<16x128xf32>
    %223 = arith.mulf %222, %222 : vector<16x128xf32>
    %224 = arith.addf %221, %223 : vector<16x128xf32>
    %225 = vector.broadcast %1 : f32 to vector<16x128xf32>
    %226 = arith.mulf %224, %225 : vector<16x128xf32>
    %cst_137 = arith.constant 1.000000e+00 : f32
    %227 = arith.mulf %cst_137, %3 : f32
    %228 = vector.broadcast %227 : f32 to vector<16x128xf32>
    %229 = arith.addf %226, %228 : vector<16x128xf32>
    %cst_138 = arith.constant 0.000000e+00 : f32
    %230 = vector.broadcast %cst_138 : f32 to vector<16x128xf32>
    %231 = arith.subf %230, %229 : vector<16x128xf32>
    %232 = math.exp %231 : vector<16x128xf32>
    %233 = arith.mulf %211, %22 : vector<16x128xf32>
    %234 = arith.mulf %232, %233 : vector<16x128xf32>
    %c0_139 = arith.constant 0 : index
    %c0_140 = arith.constant 0 : index
    %235 = vector.load %arg6[%c0_139, %c0_140] : memref<16x128xf32, #tpu.memory_space<vmem>>, vector<16x128xf32>
    %236 = arith.addf %235, %234 : vector<16x128xf32>
    %c0_141 = arith.constant 0 : index
    %c0_142 = arith.constant 0 : index
    %237 = vector.load %arg6[%c0_141, %c0_142] : memref<16x128xf32, #tpu.memory_space<vmem>>, vector<16x128xf32>
    tpu.vector_store %arg6[%c0_141, %c0_142], %236 {strides = array<i32>} : memref<16x128xf32, #tpu.memory_space<vmem>>, vector<16x128xf32>,
    %c0_143 = arith.constant 0 : index
    %c0_144 = arith.constant 0 : index
    %c0_145 = arith.constant 0 : index
    %c0_146 = arith.constant 0 : index
    %238 = vector.load %arg5[%c0_143, %c0_144, %c0_145, %c0_146] : memref<1x3x16x128xf32, #tpu.memory_space<vmem>>, vector<1x1x16x128xf32>
    %239 = vector.shape_cast %238 : vector<1x1x16x128xf32> to vector<16x128xf32>
    %240 = arith.mulf %234, %212 : vector<16x128xf32>
    %241 = arith.addf %239, %240 : vector<16x128xf32>
    %c0_147 = arith.constant 0 : index
    %c0_148 = arith.constant 0 : index
    %c0_149 = arith.constant 0 : index
    %c0_150 = arith.constant 0 : index
    %242 = vector.load %arg5[%c0_147, %c0_148, %c0_149, %c0_150] : memref<1x3x16x128xf32, #tpu.memory_space<vmem>>, vector<1x1x16x128xf32>
    %243 = vector.shape_cast %242 : vector<1x1x16x128xf32> to vector<16x128xf32>
    %244 = vector.shape_cast %241 : vector<16x128xf32> to vector<1x1x16x128xf32>
    tpu.vector_store %arg5[%c0_147, %c0_148, %c0_149, %c0_150], %244 {strides = array<i32>} : memref<1x3x16x128xf32, #tpu.memory_space<vmem>>, vector<1x1x16x128xf32>,
    %c0_151 = arith.constant 0 : index
    %c1_152 = arith.constant 1 : index
    %c0_153 = arith.constant 0 : index
    %c0_154 = arith.constant 0 : index
    %245 = vector.load %arg5[%c0_151, %c1_152, %c0_153, %c0_154] : memref<1x3x16x128xf32, #tpu.memory_space<vmem>>, vector<1x1x16x128xf32>
    %246 = vector.shape_cast %245 : vector<1x1x16x128xf32> to vector<16x128xf32>
    %247 = arith.mulf %234, %213 : vector<16x128xf32>
    %248 = arith.addf %246, %247 : vector<16x128xf32>
    %c0_155 = arith.constant 0 : index
    %c1_156 = arith.constant 1 : index
    %c0_157 = arith.constant 0 : index
    %c0_158 = arith.constant 0 : index
    %249 = vector.load %arg5[%c0_155, %c1_156, %c0_157, %c0_158] : memref<1x3x16x128xf32, #tpu.memory_space<vmem>>, vector<1x1x16x128xf32>
    %250 = vector.shape_cast %249 : vector<1x1x16x128xf32> to vector<16x128xf32>
    %251 = vector.shape_cast %248 : vector<16x128xf32> to vector<1x1x16x128xf32>
    tpu.vector_store %arg5[%c0_155, %c1_156, %c0_157, %c0_158], %251 {strides = array<i32>} : memref<1x3x16x128xf32, #tpu.memory_space<vmem>>, vector<1x1x16x128xf32>,
    %c0_159 = arith.constant 0 : index
    %c2_160 = arith.constant 2 : index
    %c0_161 = arith.constant 0 : index
    %c0_162 = arith.constant 0 : index
    %252 = vector.load %arg5[%c0_159, %c2_160, %c0_161, %c0_162] : memref<1x3x16x128xf32, #tpu.memory_space<vmem>>, vector<1x1x16x128xf32>
    %253 = vector.shape_cast %252 : vector<1x1x16x128xf32> to vector<16x128xf32>
    %254 = arith.mulf %234, %214 : vector<16x128xf32>
    %255 = arith.addf %253, %254 : vector<16x128xf32>
    %c0_163 = arith.constant 0 : index
    %c2_164 = arith.constant 2 : index
    %c0_165 = arith.constant 0 : index
    %c0_166 = arith.constant 0 : index
    %256 = vector.load %arg5[%c0_163, %c2_164, %c0_165, %c0_166] : memref<1x3x16x128xf32, #tpu.memory_space<vmem>>, vector<1x1x16x128xf32>
    %257 = vector.shape_cast %256 : vector<1x1x16x128xf32> to vector<16x128xf32>
    %258 = vector.shape_cast %255 : vector<16x128xf32> to vector<1x1x16x128xf32>
    tpu.vector_store %arg5[%c0_163, %c2_164, %c0_165, %c0_166], %258 {strides = array<i32>} : memref<1x3x16x128xf32, #tpu.memory_space<vmem>>, vector<1x1x16x128xf32>,
    %cst_167 = arith.constant 0.000000e+00 : f32
    %259 = vector.broadcast %cst_167 : f32 to vector<16x128xf32>
    %260 = arith.subf %5, %5 : vector<16x128xf32>
    %261 = arith.mulf %260, %260 : vector<16x128xf32>
    %262 = arith.addf %259, %261 : vector<16x128xf32>
    %263 = arith.subf %7, %7 : vector<16x128xf32>
    %264 = arith.mulf %263, %263 : vector<16x128xf32>
    %265 = arith.addf %262, %264 : vector<16x128xf32>
    %266 = arith.subf %9, %9 : vector<16x128xf32>
    %267 = arith.mulf %266, %266 : vector<16x128xf32>
    %268 = arith.addf %265, %267 : vector<16x128xf32>
    %269 = vector.broadcast %1 : f32 to vector<16x128xf32>
    %270 = arith.mulf %268, %269 : vector<16x128xf32>
    %cst_168 = arith.constant 0.000000e+00 : f32
    %271 = arith.mulf %cst_168, %3 : f32
    %272 = vector.broadcast %271 : f32 to vector<16x128xf32>
    %273 = arith.addf %270, %272 : vector<16x128xf32>
    %cst_169 = arith.constant 0.000000e+00 : f32
    %274 = vector.broadcast %cst_169 : f32 to vector<16x128xf32>
    %275 = arith.subf %274, %273 : vector<16x128xf32>
    %276 = math.exp %275 : vector<16x128xf32>
    %277 = arith.mulf %211, %33 : vector<16x128xf32>
    %278 = arith.mulf %276, %277 : vector<16x128xf32>
    %c0_170 = arith.constant 0 : index
    %c0_171 = arith.constant 0 : index
    %279 = vector.load %arg6[%c0_170, %c0_171] : memref<16x128xf32, #tpu.memory_space<vmem>>, vector<16x128xf32>
    %280 = arith.addf %279, %278 : vector<16x128xf32>
    %c0_172 = arith.constant 0 : index
    %c0_173 = arith.constant 0 : index
    %281 = vector.load %arg6[%c0_172, %c0_173] : memref<16x128xf32, #tpu.memory_space<vmem>>, vector<16x128xf32>
    tpu.vector_store %arg6[%c0_172, %c0_173], %280 {strides = array<i32>} : memref<16x128xf32, #tpu.memory_space<vmem>>, vector<16x128xf32>,
    %c0_174 = arith.constant 0 : index
    %c0_175 = arith.constant 0 : index
    %c0_176 = arith.constant 0 : index
    %c0_177 = arith.constant 0 : index
    %282 = vector.load %arg5[%c0_174, %c0_175, %c0_176, %c0_177] : memref<1x3x16x128xf32, #tpu.memory_space<vmem>>, vector<1x1x16x128xf32>
    %283 = vector.shape_cast %282 : vector<1x1x16x128xf32> to vector<16x128xf32>
    %284 = arith.mulf %278, %5 : vector<16x128xf32>
    %285 = arith.addf %283, %284 : vector<16x128xf32>
    %c0_178 = arith.constant 0 : index
    %c0_179 = arith.constant 0 : index
    %c0_180 = arith.constant 0 : index
    %c0_181 = arith.constant 0 : index
    %286 = vector.load %arg5[%c0_178, %c0_179, %c0_180, %c0_181] : memref<1x3x16x128xf32, #tpu.memory_space<vmem>>, vector<1x1x16x128xf32>
    %287 = vector.shape_cast %286 : vector<1x1x16x128xf32> to vector<16x128xf32>
    %288 = vector.shape_cast %285 : vector<16x128xf32> to vector<1x1x16x128xf32>
    tpu.vector_store %arg5[%c0_178, %c0_179, %c0_180, %c0_181], %288 {strides = array<i32>} : memref<1x3x16x128xf32, #tpu.memory_space<vmem>>, vector<1x1x16x128xf32>,
    %c0_182 = arith.constant 0 : index
    %c1_183 = arith.constant 1 : index
    %c0_184 = arith.constant 0 : index
    %c0_185 = arith.constant 0 : index
    %289 = vector.load %arg5[%c0_182, %c1_183, %c0_184, %c0_185] : memref<1x3x16x128xf32, #tpu.memory_space<vmem>>, vector<1x1x16x128xf32>
    %290 = vector.shape_cast %289 : vector<1x1x16x128xf32> to vector<16x128xf32>
    %291 = arith.mulf %278, %7 : vector<16x128xf32>
    %292 = arith.addf %290, %291 : vector<16x128xf32>
    %c0_186 = arith.constant 0 : index
    %c1_187 = arith.constant 1 : index
    %c0_188 = arith.constant 0 : index
    %c0_189 = arith.constant 0 : index
    %293 = vector.load %arg5[%c0_186, %c1_187, %c0_188, %c0_189] : memref<1x3x16x128xf32, #tpu.memory_space<vmem>>, vector<1x1x16x128xf32>
    %294 = vector.shape_cast %293 : vector<1x1x16x128xf32> to vector<16x128xf32>
    %295 = vector.shape_cast %292 : vector<16x128xf32> to vector<1x1x16x128xf32>
    tpu.vector_store %arg5[%c0_186, %c1_187, %c0_188, %c0_189], %295 {strides = array<i32>} : memref<1x3x16x128xf32, #tpu.memory_space<vmem>>, vector<1x1x16x128xf32>,
    %c0_190 = arith.constant 0 : index
    %c2_191 = arith.constant 2 : index
    %c0_192 = arith.constant 0 : index
    %c0_193 = arith.constant 0 : index
    %296 = vector.load %arg5[%c0_190, %c2_191, %c0_192, %c0_193] : memref<1x3x16x128xf32, #tpu.memory_space<vmem>>, vector<1x1x16x128xf32>
    %297 = vector.shape_cast %296 : vector<1x1x16x128xf32> to vector<16x128xf32>
    %298 = arith.mulf %278, %9 : vector<16x128xf32>
    %299 = arith.addf %297, %298 : vector<16x128xf32>
    %c0_194 = arith.constant 0 : index
    %c2_195 = arith.constant 2 : index
    %c0_196 = arith.constant 0 : index
    %c0_197 = arith.constant 0 : index
    %300 = vector.load %arg5[%c0_194, %c2_195, %c0_196, %c0_197] : memref<1x3x16x128xf32, #tpu.memory_space<vmem>>, vector<1x1x16x128xf32>
    %301 = vector.shape_cast %300 : vector<1x1x16x128xf32> to vector<16x128xf32>
    %302 = vector.shape_cast %299 : vector<16x128xf32> to vector<1x1x16x128xf32>
    tpu.vector_store %arg5[%c0_194, %c2_195, %c0_196, %c0_197], %302 {strides = array<i32>} : memref<1x3x16x128xf32, #tpu.memory_space<vmem>>, vector<1x1x16x128xf32>,
    %c127_i32_198 = arith.constant 127 : i32
    %303 = tpu.dynamic_rotate %5 by %c127_i32_198 dim 1 : vector<16x128xf32>, i32 -> vector<16x128xf32>
    %c127_i32_199 = arith.constant 127 : i32
    %304 = tpu.dynamic_rotate %7 by %c127_i32_199 dim 1 : vector<16x128xf32>, i32 -> vector<16x128xf32>
    %c127_i32_200 = arith.constant 127 : i32
    %305 = tpu.dynamic_rotate %9 by %c127_i32_200 dim 1 : vector<16x128xf32>, i32 -> vector<16x128xf32>
    %cst_201 = arith.constant 0.000000e+00 : f32
    %306 = vector.broadcast %cst_201 : f32 to vector<16x128xf32>
    %307 = arith.subf %303, %5 : vector<16x128xf32>
    %308 = arith.mulf %307, %307 : vector<16x128xf32>
    %309 = arith.addf %306, %308 : vector<16x128xf32>
    %310 = arith.subf %304, %7 : vector<16x128xf32>
    %311 = arith.mulf %310, %310 : vector<16x128xf32>
    %312 = arith.addf %309, %311 : vector<16x128xf32>
    %313 = arith.subf %305, %9 : vector<16x128xf32>
    %314 = arith.mulf %313, %313 : vector<16x128xf32>
    %315 = arith.addf %312, %314 : vector<16x128xf32>
    %316 = vector.broadcast %1 : f32 to vector<16x128xf32>
    %317 = arith.mulf %315, %316 : vector<16x128xf32>
    %cst_202 = arith.constant 1.000000e+00 : f32
    %318 = arith.mulf %cst_202, %3 : f32
    %319 = vector.broadcast %318 : f32 to vector<16x128xf32>
    %320 = arith.addf %317, %319 : vector<16x128xf32>
    %cst_203 = arith.constant 0.000000e+00 : f32
    %321 = vector.broadcast %cst_203 : f32 to vector<16x128xf32>
    %322 = arith.subf %321, %320 : vector<16x128xf32>
    %323 = math.exp %322 : vector<16x128xf32>
    %324 = arith.mulf %211, %44 : vector<16x128xf32>
    %325 = arith.mulf %323, %324 : vector<16x128xf32>
    %c0_204 = arith.constant 0 : index
    %c0_205 = arith.constant 0 : index
    %326 = vector.load %arg6[%c0_204, %c0_205] : memref<16x128xf32, #tpu.memory_space<vmem>>, vector<16x128xf32>
    %327 = arith.addf %326, %325 : vector<16x128xf32>
    %c0_206 = arith.constant 0 : index
    %c0_207 = arith.constant 0 : index
    %328 = vector.load %arg6[%c0_206, %c0_207] : memref<16x128xf32, #tpu.memory_space<vmem>>, vector<16x128xf32>
    tpu.vector_store %arg6[%c0_206, %c0_207], %327 {strides = array<i32>} : memref<16x128xf32, #tpu.memory_space<vmem>>, vector<16x128xf32>,
    %c0_208 = arith.constant 0 : index
    %c0_209 = arith.constant 0 : index
    %c0_210 = arith.constant 0 : index
    %c0_211 = arith.constant 0 : index
    %329 = vector.load %arg5[%c0_208, %c0_209, %c0_210, %c0_211] : memref<1x3x16x128xf32, #tpu.memory_space<vmem>>, vector<1x1x16x128xf32>
    %330 = vector.shape_cast %329 : vector<1x1x16x128xf32> to vector<16x128xf32>
    %331 = arith.mulf %325, %303 : vector<16x128xf32>
    %332 = arith.addf %330, %331 : vector<16x128xf32>
    %c0_212 = arith.constant 0 : index
    %c0_213 = arith.constant 0 : index
    %c0_214 = arith.constant 0 : index
    %c0_215 = arith.constant 0 : index
    %333 = vector.load %arg5[%c0_212, %c0_213, %c0_214, %c0_215] : memref<1x3x16x128xf32, #tpu.memory_space<vmem>>, vector<1x1x16x128xf32>
    %334 = vector.shape_cast %333 : vector<1x1x16x128xf32> to vector<16x128xf32>
    %335 = vector.shape_cast %332 : vector<16x128xf32> to vector<1x1x16x128xf32>
    tpu.vector_store %arg5[%c0_212, %c0_213, %c0_214, %c0_215], %335 {strides = array<i32>} : memref<1x3x16x128xf32, #tpu.memory_space<vmem>>, vector<1x1x16x128xf32>,
    %c0_216 = arith.constant 0 : index
    %c1_217 = arith.constant 1 : index
    %c0_218 = arith.constant 0 : index
    %c0_219 = arith.constant 0 : index
    %336 = vector.load %arg5[%c0_216, %c1_217, %c0_218, %c0_219] : memref<1x3x16x128xf32, #tpu.memory_space<vmem>>, vector<1x1x16x128xf32>
    %337 = vector.shape_cast %336 : vector<1x1x16x128xf32> to vector<16x128xf32>
    %338 = arith.mulf %325, %304 : vector<16x128xf32>
    %339 = arith.addf %337, %338 : vector<16x128xf32>
    %c0_220 = arith.constant 0 : index
    %c1_221 = arith.constant 1 : index
    %c0_222 = arith.constant 0 : index
    %c0_223 = arith.constant 0 : index
    %340 = vector.load %arg5[%c0_220, %c1_221, %c0_222, %c0_223] : memref<1x3x16x128xf32, #tpu.memory_space<vmem>>, vector<1x1x16x128xf32>
    %341 = vector.shape_cast %340 : vector<1x1x16x128xf32> to vector<16x128xf32>
    %342 = vector.shape_cast %339 : vector<16x128xf32> to vector<1x1x16x128xf32>
    tpu.vector_store %arg5[%c0_220, %c1_221, %c0_222, %c0_223], %342 {strides = array<i32>} : memref<1x3x16x128xf32, #tpu.memory_space<vmem>>, vector<1x1x16x128xf32>,
    %c0_224 = arith.constant 0 : index
    %c2_225 = arith.constant 2 : index
    %c0_226 = arith.constant 0 : index
    %c0_227 = arith.constant 0 : index
    %343 = vector.load %arg5[%c0_224, %c2_225, %c0_226, %c0_227] : memref<1x3x16x128xf32, #tpu.memory_space<vmem>>, vector<1x1x16x128xf32>
    %344 = vector.shape_cast %343 : vector<1x1x16x128xf32> to vector<16x128xf32>
    %345 = arith.mulf %325, %305 : vector<16x128xf32>
    %346 = arith.addf %344, %345 : vector<16x128xf32>
    %c0_228 = arith.constant 0 : index
    %c2_229 = arith.constant 2 : index
    %c0_230 = arith.constant 0 : index
    %c0_231 = arith.constant 0 : index
    %347 = vector.load %arg5[%c0_228, %c2_229, %c0_230, %c0_231] : memref<1x3x16x128xf32, #tpu.memory_space<vmem>>, vector<1x1x16x128xf32>
    %348 = vector.shape_cast %347 : vector<1x1x16x128xf32> to vector<16x128xf32>
    %349 = vector.shape_cast %346 : vector<16x128xf32> to vector<1x1x16x128xf32>
    tpu.vector_store %arg5[%c0_228, %c2_229, %c0_230, %c0_231], %349 {strides = array<i32>} : memref<1x3x16x128xf32, #tpu.memory_space<vmem>>, vector<1x1x16x128xf32>,
    %c15_i32 = arith.constant 15 : i32
    %350 = tpu.dynamic_rotate %5 by %c15_i32 dim 0 : vector<16x128xf32>, i32 -> vector<16x128xf32>
    %c15_i32_232 = arith.constant 15 : i32
    %351 = tpu.dynamic_rotate %7 by %c15_i32_232 dim 0 : vector<16x128xf32>, i32 -> vector<16x128xf32>
    %c15_i32_233 = arith.constant 15 : i32
    %352 = tpu.dynamic_rotate %9 by %c15_i32_233 dim 0 : vector<16x128xf32>, i32 -> vector<16x128xf32>
    %c1_i32_234 = arith.constant 1 : i32
    %353 = vector.broadcast %c1_i32_234 : i32 to vector<16x128xi32>
    %354 = arith.addi %10, %353 : vector<16x128xi32>
    %c0_i32_235 = arith.constant 0 : i32
    %355 = vector.broadcast %c0_i32_235 : i32 to vector<16x128xi32>
    %356 = arith.cmpi sge, %354, %355 : vector<16x128xi32>
    %c1_i32_236 = arith.constant 1 : i32
    %357 = vector.broadcast %c1_i32_236 : i32 to vector<16x128xi32>
    %358 = arith.addi %10, %357 : vector<16x128xi32>
    %c16_i32_237 = arith.constant 16 : i32
    %359 = vector.broadcast %c16_i32_237 : i32 to vector<16x128xi32>
    %360 = arith.cmpi slt, %358, %359 : vector<16x128xi32>
    %361 = arith.andi %356, %360 : vector<16x128xi1>
    %362 = arith.extui %361 : vector<16x128xi1> to vector<16x128xi32>
    %363 = arith.sitofp %362 : vector<16x128xi32> to vector<16x128xf32>
    %c1_i32_238 = arith.constant 1 : i32
    %364 = tpu.dynamic_rotate %350 by %c1_i32_238 dim 1 : vector<16x128xf32>, i32 -> vector<16x128xf32>
    %c1_i32_239 = arith.constant 1 : i32
    %365 = tpu.dynamic_rotate %351 by %c1_i32_239 dim 1 : vector<16x128xf32>, i32 -> vector<16x128xf32>
    %c1_i32_240 = arith.constant 1 : i32
    %366 = tpu.dynamic_rotate %352 by %c1_i32_240 dim 1 : vector<16x128xf32>, i32 -> vector<16x128xf32>
    %cst_241 = arith.constant 0.000000e+00 : f32
    %367 = vector.broadcast %cst_241 : f32 to vector<16x128xf32>
    %368 = arith.subf %364, %5 : vector<16x128xf32>
    %369 = arith.mulf %368, %368 : vector<16x128xf32>
    %370 = arith.addf %367, %369 : vector<16x128xf32>
    %371 = arith.subf %365, %7 : vector<16x128xf32>
    %372 = arith.mulf %371, %371 : vector<16x128xf32>
    %373 = arith.addf %370, %372 : vector<16x128xf32>
    %374 = arith.subf %366, %9 : vector<16x128xf32>
    %375 = arith.mulf %374, %374 : vector<16x128xf32>
    %376 = arith.addf %373, %375 : vector<16x128xf32>
    %377 = vector.broadcast %1 : f32 to vector<16x128xf32>
    %378 = arith.mulf %376, %377 : vector<16x128xf32>
    %cst_242 = arith.constant 2.000000e+00 : f32
    %379 = arith.mulf %cst_242, %3 : f32
    %380 = vector.broadcast %379 : f32 to vector<16x128xf32>
    %381 = arith.addf %378, %380 : vector<16x128xf32>
    %cst_243 = arith.constant 0.000000e+00 : f32
    %382 = vector.broadcast %cst_243 : f32 to vector<16x128xf32>
    %383 = arith.subf %382, %381 : vector<16x128xf32>
    %384 = math.exp %383 : vector<16x128xf32>
    %385 = arith.mulf %363, %22 : vector<16x128xf32>
    %386 = arith.mulf %384, %385 : vector<16x128xf32>
    %c0_244 = arith.constant 0 : index
    %c0_245 = arith.constant 0 : index
    %387 = vector.load %arg6[%c0_244, %c0_245] : memref<16x128xf32, #tpu.memory_space<vmem>>, vector<16x128xf32>
    %388 = arith.addf %387, %386 : vector<16x128xf32>
    %c0_246 = arith.constant 0 : index
    %c0_247 = arith.constant 0 : index
    %389 = vector.load %arg6[%c0_246, %c0_247] : memref<16x128xf32, #tpu.memory_space<vmem>>, vector<16x128xf32>
    tpu.vector_store %arg6[%c0_246, %c0_247], %388 {strides = array<i32>} : memref<16x128xf32, #tpu.memory_space<vmem>>, vector<16x128xf32>,
    %c0_248 = arith.constant 0 : index
    %c0_249 = arith.constant 0 : index
    %c0_250 = arith.constant 0 : index
    %c0_251 = arith.constant 0 : index
    %390 = vector.load %arg5[%c0_248, %c0_249, %c0_250, %c0_251] : memref<1x3x16x128xf32, #tpu.memory_space<vmem>>, vector<1x1x16x128xf32>
    %391 = vector.shape_cast %390 : vector<1x1x16x128xf32> to vector<16x128xf32>
    %392 = arith.mulf %386, %364 : vector<16x128xf32>
    %393 = arith.addf %391, %392 : vector<16x128xf32>
    %c0_252 = arith.constant 0 : index
    %c0_253 = arith.constant 0 : index
    %c0_254 = arith.constant 0 : index
    %c0_255 = arith.constant 0 : index
    %394 = vector.load %arg5[%c0_252, %c0_253, %c0_254, %c0_255] : memref<1x3x16x128xf32, #tpu.memory_space<vmem>>, vector<1x1x16x128xf32>
    %395 = vector.shape_cast %394 : vector<1x1x16x128xf32> to vector<16x128xf32>
    %396 = vector.shape_cast %393 : vector<16x128xf32> to vector<1x1x16x128xf32>
    tpu.vector_store %arg5[%c0_252, %c0_253, %c0_254, %c0_255], %396 {strides = array<i32>} : memref<1x3x16x128xf32, #tpu.memory_space<vmem>>, vector<1x1x16x128xf32>,
    %c0_256 = arith.constant 0 : index
    %c1_257 = arith.constant 1 : index
    %c0_258 = arith.constant 0 : index
    %c0_259 = arith.constant 0 : index
    %397 = vector.load %arg5[%c0_256, %c1_257, %c0_258, %c0_259] : memref<1x3x16x128xf32, #tpu.memory_space<vmem>>, vector<1x1x16x128xf32>
    %398 = vector.shape_cast %397 : vector<1x1x16x128xf32> to vector<16x128xf32>
    %399 = arith.mulf %386, %365 : vector<16x128xf32>
    %400 = arith.addf %398, %399 : vector<16x128xf32>
    %c0_260 = arith.constant 0 : index
    %c1_261 = arith.constant 1 : index
    %c0_262 = arith.constant 0 : index
    %c0_263 = arith.constant 0 : index
    %401 = vector.load %arg5[%c0_260, %c1_261, %c0_262, %c0_263] : memref<1x3x16x128xf32, #tpu.memory_space<vmem>>, vector<1x1x16x128xf32>
    %402 = vector.shape_cast %401 : vector<1x1x16x128xf32> to vector<16x128xf32>
    %403 = vector.shape_cast %400 : vector<16x128xf32> to vector<1x1x16x128xf32>
    tpu.vector_store %arg5[%c0_260, %c1_261, %c0_262, %c0_263], %403 {strides = array<i32>} : memref<1x3x16x128xf32, #tpu.memory_space<vmem>>, vector<1x1x16x128xf32>,
    %c0_264 = arith.constant 0 : index
    %c2_265 = arith.constant 2 : index
    %c0_266 = arith.constant 0 : index
    %c0_267 = arith.constant 0 : index
    %404 = vector.load %arg5[%c0_264, %c2_265, %c0_266, %c0_267] : memref<1x3x16x128xf32, #tpu.memory_space<vmem>>, vector<1x1x16x128xf32>
    %405 = vector.shape_cast %404 : vector<1x1x16x128xf32> to vector<16x128xf32>
    %406 = arith.mulf %386, %366 : vector<16x128xf32>
    %407 = arith.addf %405, %406 : vector<16x128xf32>
    %c0_268 = arith.constant 0 : index
    %c2_269 = arith.constant 2 : index
    %c0_270 = arith.constant 0 : index
    %c0_271 = arith.constant 0 : index
    %408 = vector.load %arg5[%c0_268, %c2_269, %c0_270, %c0_271] : memref<1x3x16x128xf32, #tpu.memory_space<vmem>>, vector<1x1x16x128xf32>
    %409 = vector.shape_cast %408 : vector<1x1x16x128xf32> to vector<16x128xf32>
    %410 = vector.shape_cast %407 : vector<16x128xf32> to vector<1x1x16x128xf32>
    tpu.vector_store %arg5[%c0_268, %c2_269, %c0_270, %c0_271], %410 {strides = array<i32>} : memref<1x3x16x128xf32, #tpu.memory_space<vmem>>, vector<1x1x16x128xf32>,
    %cst_272 = arith.constant 0.000000e+00 : f32
    %411 = vector.broadcast %cst_272 : f32 to vector<16x128xf32>
    %412 = arith.subf %350, %5 : vector<16x128xf32>
    %413 = arith.mulf %412, %412 : vector<16x128xf32>
    %414 = arith.addf %411, %413 : vector<16x128xf32>
    %415 = arith.subf %351, %7 : vector<16x128xf32>
    %416 = arith.mulf %415, %415 : vector<16x128xf32>
    %417 = arith.addf %414, %416 : vector<16x128xf32>
    %418 = arith.subf %352, %9 : vector<16x128xf32>
    %419 = arith.mulf %418, %418 : vector<16x128xf32>
    %420 = arith.addf %417, %419 : vector<16x128xf32>
    %421 = vector.broadcast %1 : f32 to vector<16x128xf32>
    %422 = arith.mulf %420, %421 : vector<16x128xf32>
    %cst_273 = arith.constant 1.000000e+00 : f32
    %423 = arith.mulf %cst_273, %3 : f32
    %424 = vector.broadcast %423 : f32 to vector<16x128xf32>
    %425 = arith.addf %422, %424 : vector<16x128xf32>
    %cst_274 = arith.constant 0.000000e+00 : f32
    %426 = vector.broadcast %cst_274 : f32 to vector<16x128xf32>
    %427 = arith.subf %426, %425 : vector<16x128xf32>
    %428 = math.exp %427 : vector<16x128xf32>
    %429 = arith.mulf %363, %33 : vector<16x128xf32>
    %430 = arith.mulf %428, %429 : vector<16x128xf32>
    %c0_275 = arith.constant 0 : index
    %c0_276 = arith.constant 0 : index
    %431 = vector.load %arg6[%c0_275, %c0_276] : memref<16x128xf32, #tpu.memory_space<vmem>>, vector<16x128xf32>
    %432 = arith.addf %431, %430 : vector<16x128xf32>
    %c0_277 = arith.constant 0 : index
    %c0_278 = arith.constant 0 : index
    %433 = vector.load %arg6[%c0_277, %c0_278] : memref<16x128xf32, #tpu.memory_space<vmem>>, vector<16x128xf32>
    tpu.vector_store %arg6[%c0_277, %c0_278], %432 {strides = array<i32>} : memref<16x128xf32, #tpu.memory_space<vmem>>, vector<16x128xf32>,
    %c0_279 = arith.constant 0 : index
    %c0_280 = arith.constant 0 : index
    %c0_281 = arith.constant 0 : index
    %c0_282 = arith.constant 0 : index
    %434 = vector.load %arg5[%c0_279, %c0_280, %c0_281, %c0_282] : memref<1x3x16x128xf32, #tpu.memory_space<vmem>>, vector<1x1x16x128xf32>
    %435 = vector.shape_cast %434 : vector<1x1x16x128xf32> to vector<16x128xf32>
    %436 = arith.mulf %430, %350 : vector<16x128xf32>
    %437 = arith.addf %435, %436 : vector<16x128xf32>
    %c0_283 = arith.constant 0 : index
    %c0_284 = arith.constant 0 : index
    %c0_285 = arith.constant 0 : index
    %c0_286 = arith.constant 0 : index
    %438 = vector.load %arg5[%c0_283, %c0_284, %c0_285, %c0_286] : memref<1x3x16x128xf32, #tpu.memory_space<vmem>>, vector<1x1x16x128xf32>
    %439 = vector.shape_cast %438 : vector<1x1x16x128xf32> to vector<16x128xf32>
    %440 = vector.shape_cast %437 : vector<16x128xf32> to vector<1x1x16x128xf32>
    tpu.vector_store %arg5[%c0_283, %c0_284, %c0_285, %c0_286], %440 {strides = array<i32>} : memref<1x3x16x128xf32, #tpu.memory_space<vmem>>, vector<1x1x16x128xf32>,
    %c0_287 = arith.constant 0 : index
    %c1_288 = arith.constant 1 : index
    %c0_289 = arith.constant 0 : index
    %c0_290 = arith.constant 0 : index
    %441 = vector.load %arg5[%c0_287, %c1_288, %c0_289, %c0_290] : memref<1x3x16x128xf32, #tpu.memory_space<vmem>>, vector<1x1x16x128xf32>
    %442 = vector.shape_cast %441 : vector<1x1x16x128xf32> to vector<16x128xf32>
    %443 = arith.mulf %430, %351 : vector<16x128xf32>
    %444 = arith.addf %442, %443 : vector<16x128xf32>
    %c0_291 = arith.constant 0 : index
    %c1_292 = arith.constant 1 : index
    %c0_293 = arith.constant 0 : index
    %c0_294 = arith.constant 0 : index
    %445 = vector.load %arg5[%c0_291, %c1_292, %c0_293, %c0_294] : memref<1x3x16x128xf32, #tpu.memory_space<vmem>>, vector<1x1x16x128xf32>
    %446 = vector.shape_cast %445 : vector<1x1x16x128xf32> to vector<16x128xf32>
    %447 = vector.shape_cast %444 : vector<16x128xf32> to vector<1x1x16x128xf32>
    tpu.vector_store %arg5[%c0_291, %c1_292, %c0_293, %c0_294], %447 {strides = array<i32>} : memref<1x3x16x128xf32, #tpu.memory_space<vmem>>, vector<1x1x16x128xf32>,
    %c0_295 = arith.constant 0 : index
    %c2_296 = arith.constant 2 : index
    %c0_297 = arith.constant 0 : index
    %c0_298 = arith.constant 0 : index
    %448 = vector.load %arg5[%c0_295, %c2_296, %c0_297, %c0_298] : memref<1x3x16x128xf32, #tpu.memory_space<vmem>>, vector<1x1x16x128xf32>
    %449 = vector.shape_cast %448 : vector<1x1x16x128xf32> to vector<16x128xf32>
    %450 = arith.mulf %430, %352 : vector<16x128xf32>
    %451 = arith.addf %449, %450 : vector<16x128xf32>
    %c0_299 = arith.constant 0 : index
    %c2_300 = arith.constant 2 : index
    %c0_301 = arith.constant 0 : index
    %c0_302 = arith.constant 0 : index
    %452 = vector.load %arg5[%c0_299, %c2_300, %c0_301, %c0_302] : memref<1x3x16x128xf32, #tpu.memory_space<vmem>>, vector<1x1x16x128xf32>
    %453 = vector.shape_cast %452 : vector<1x1x16x128xf32> to vector<16x128xf32>
    %454 = vector.shape_cast %451 : vector<16x128xf32> to vector<1x1x16x128xf32>
    tpu.vector_store %arg5[%c0_299, %c2_300, %c0_301, %c0_302], %454 {strides = array<i32>} : memref<1x3x16x128xf32, #tpu.memory_space<vmem>>, vector<1x1x16x128xf32>,
    %c127_i32_303 = arith.constant 127 : i32
    %455 = tpu.dynamic_rotate %350 by %c127_i32_303 dim 1 : vector<16x128xf32>, i32 -> vector<16x128xf32>
    %c127_i32_304 = arith.constant 127 : i32
    %456 = tpu.dynamic_rotate %351 by %c127_i32_304 dim 1 : vector<16x128xf32>, i32 -> vector<16x128xf32>
    %c127_i32_305 = arith.constant 127 : i32
    %457 = tpu.dynamic_rotate %352 by %c127_i32_305 dim 1 : vector<16x128xf32>, i32 -> vector<16x128xf32>
    %cst_306 = arith.constant 0.000000e+00 : f32
    %458 = vector.broadcast %cst_306 : f32 to vector<16x128xf32>
    %459 = arith.subf %455, %5 : vector<16x128xf32>
    %460 = arith.mulf %459, %459 : vector<16x128xf32>
    %461 = arith.addf %458, %460 : vector<16x128xf32>
    %462 = arith.subf %456, %7 : vector<16x128xf32>
    %463 = arith.mulf %462, %462 : vector<16x128xf32>
    %464 = arith.addf %461, %463 : vector<16x128xf32>
    %465 = arith.subf %457, %9 : vector<16x128xf32>
    %466 = arith.mulf %465, %465 : vector<16x128xf32>
    %467 = arith.addf %464, %466 : vector<16x128xf32>
    %468 = vector.broadcast %1 : f32 to vector<16x128xf32>
    %469 = arith.mulf %467, %468 : vector<16x128xf32>
    %cst_307 = arith.constant 2.000000e+00 : f32
    %470 = arith.mulf %cst_307, %3 : f32
    %471 = vector.broadcast %470 : f32 to vector<16x128xf32>
    %472 = arith.addf %469, %471 : vector<16x128xf32>
    %cst_308 = arith.constant 0.000000e+00 : f32
    %473 = vector.broadcast %cst_308 : f32 to vector<16x128xf32>
    %474 = arith.subf %473, %472 : vector<16x128xf32>
    %475 = math.exp %474 : vector<16x128xf32>
    %476 = arith.mulf %363, %44 : vector<16x128xf32>
    %477 = arith.mulf %475, %476 : vector<16x128xf32>
    %c0_309 = arith.constant 0 : index
    %c0_310 = arith.constant 0 : index
    %478 = vector.load %arg6[%c0_309, %c0_310] : memref<16x128xf32, #tpu.memory_space<vmem>>, vector<16x128xf32>
    %479 = arith.addf %478, %477 : vector<16x128xf32>
    %c0_311 = arith.constant 0 : index
    %c0_312 = arith.constant 0 : index
    %480 = vector.load %arg6[%c0_311, %c0_312] : memref<16x128xf32, #tpu.memory_space<vmem>>, vector<16x128xf32>
    tpu.vector_store %arg6[%c0_311, %c0_312], %479 {strides = array<i32>} : memref<16x128xf32, #tpu.memory_space<vmem>>, vector<16x128xf32>,
    %c0_313 = arith.constant 0 : index
    %c0_314 = arith.constant 0 : index
    %c0_315 = arith.constant 0 : index
    %c0_316 = arith.constant 0 : index
    %481 = vector.load %arg5[%c0_313, %c0_314, %c0_315, %c0_316] : memref<1x3x16x128xf32, #tpu.memory_space<vmem>>, vector<1x1x16x128xf32>
    %482 = vector.shape_cast %481 : vector<1x1x16x128xf32> to vector<16x128xf32>
    %483 = arith.mulf %477, %455 : vector<16x128xf32>
    %484 = arith.addf %482, %483 : vector<16x128xf32>
    %c0_317 = arith.constant 0 : index
    %c0_318 = arith.constant 0 : index
    %c0_319 = arith.constant 0 : index
    %c0_320 = arith.constant 0 : index
    %485 = vector.load %arg5[%c0_317, %c0_318, %c0_319, %c0_320] : memref<1x3x16x128xf32, #tpu.memory_space<vmem>>, vector<1x1x16x128xf32>
    %486 = vector.shape_cast %485 : vector<1x1x16x128xf32> to vector<16x128xf32>
    %487 = vector.shape_cast %484 : vector<16x128xf32> to vector<1x1x16x128xf32>
    tpu.vector_store %arg5[%c0_317, %c0_318, %c0_319, %c0_320], %487 {strides = array<i32>} : memref<1x3x16x128xf32, #tpu.memory_space<vmem>>, vector<1x1x16x128xf32>,
    %c0_321 = arith.constant 0 : index
    %c1_322 = arith.constant 1 : index
    %c0_323 = arith.constant 0 : index
    %c0_324 = arith.constant 0 : index
    %488 = vector.load %arg5[%c0_321, %c1_322, %c0_323, %c0_324] : memref<1x3x16x128xf32, #tpu.memory_space<vmem>>, vector<1x1x16x128xf32>
    %489 = vector.shape_cast %488 : vector<1x1x16x128xf32> to vector<16x128xf32>
    %490 = arith.mulf %477, %456 : vector<16x128xf32>
    %491 = arith.addf %489, %490 : vector<16x128xf32>
    %c0_325 = arith.constant 0 : index
    %c1_326 = arith.constant 1 : index
    %c0_327 = arith.constant 0 : index
    %c0_328 = arith.constant 0 : index
    %492 = vector.load %arg5[%c0_325, %c1_326, %c0_327, %c0_328] : memref<1x3x16x128xf32, #tpu.memory_space<vmem>>, vector<1x1x16x128xf32>
    %493 = vector.shape_cast %492 : vector<1x1x16x128xf32> to vector<16x128xf32>
    %494 = vector.shape_cast %491 : vector<16x128xf32> to vector<1x1x16x128xf32>
    tpu.vector_store %arg5[%c0_325, %c1_326, %c0_327, %c0_328], %494 {strides = array<i32>} : memref<1x3x16x128xf32, #tpu.memory_space<vmem>>, vector<1x1x16x128xf32>,
    %c0_329 = arith.constant 0 : index
    %c2_330 = arith.constant 2 : index
    %c0_331 = arith.constant 0 : index
    %c0_332 = arith.constant 0 : index
    %495 = vector.load %arg5[%c0_329, %c2_330, %c0_331, %c0_332] : memref<1x3x16x128xf32, #tpu.memory_space<vmem>>, vector<1x1x16x128xf32>
    %496 = vector.shape_cast %495 : vector<1x1x16x128xf32> to vector<16x128xf32>
    %497 = arith.mulf %477, %457 : vector<16x128xf32>
    %498 = arith.addf %496, %497 : vector<16x128xf32>
    %c0_333 = arith.constant 0 : index
    %c2_334 = arith.constant 2 : index
    %c0_335 = arith.constant 0 : index
    %c0_336 = arith.constant 0 : index
    %499 = vector.load %arg5[%c0_333, %c2_334, %c0_335, %c0_336] : memref<1x3x16x128xf32, #tpu.memory_space<vmem>>, vector<1x1x16x128xf32>
    %500 = vector.shape_cast %499 : vector<1x1x16x128xf32> to vector<16x128xf32>
    %501 = vector.shape_cast %498 : vector<16x128xf32> to vector<1x1x16x128xf32>
    tpu.vector_store %arg5[%c0_333, %c2_334, %c0_335, %c0_336], %501 {strides = array<i32>} : memref<1x3x16x128xf32, #tpu.memory_space<vmem>>, vector<1x1x16x128xf32>,
    %c0_337 = arith.constant 0 : index
    %c0_338 = arith.constant 0 : index
    %502 = vector.load %arg6[%c0_337, %c0_338] : memref<16x128xf32, #tpu.memory_space<vmem>>, vector<16x128xf32>
    %cst_339 = arith.constant 9.99999997E-7 : f32
    %503 = vector.broadcast %cst_339 : f32 to vector<16x128xf32>
    %504 = arith.maximumf %502, %503 : vector<16x128xf32>
    %505 = tpu.reciprocal %504 {approx = true} : vector<16x128xf32> -> vector<16x128xf32>
    %c0_340 = arith.constant 0 : index
    %c0_341 = arith.constant 0 : index
    %c0_342 = arith.constant 0 : index
    %c0_343 = arith.constant 0 : index
    %506 = vector.load %arg5[%c0_340, %c0_341, %c0_342, %c0_343] : memref<1x3x16x128xf32, #tpu.memory_space<vmem>>, vector<1x1x16x128xf32>
    %507 = vector.shape_cast %506 : vector<1x1x16x128xf32> to vector<16x128xf32>
    %508 = arith.mulf %507, %505 : vector<16x128xf32>
    %c0_344 = arith.constant 0 : index
    %c0_345 = arith.constant 0 : index
    %c0_346 = arith.constant 0 : index
    %c0_347 = arith.constant 0 : index
    %509 = vector.load %arg5[%c0_344, %c0_345, %c0_346, %c0_347] : memref<1x3x16x128xf32, #tpu.memory_space<vmem>>, vector<1x1x16x128xf32>
    %510 = vector.shape_cast %509 : vector<1x1x16x128xf32> to vector<16x128xf32>
    %511 = vector.shape_cast %508 : vector<16x128xf32> to vector<1x1x16x128xf32>
    tpu.vector_store %arg5[%c0_344, %c0_345, %c0_346, %c0_347], %511 {strides = array<i32>} : memref<1x3x16x128xf32, #tpu.memory_space<vmem>>, vector<1x1x16x128xf32>,
    %c0_348 = arith.constant 0 : index
    %c1_349 = arith.constant 1 : index
    %c0_350 = arith.constant 0 : index
    %c0_351 = arith.constant 0 : index
    %512 = vector.load %arg5[%c0_348, %c1_349, %c0_350, %c0_351] : memref<1x3x16x128xf32, #tpu.memory_space<vmem>>, vector<1x1x16x128xf32>
    %513 = vector.shape_cast %512 : vector<1x1x16x128xf32> to vector<16x128xf32>
    %514 = arith.mulf %513, %505 : vector<16x128xf32>
    %c0_352 = arith.constant 0 : index
    %c1_353 = arith.constant 1 : index
    %c0_354 = arith.constant 0 : index
    %c0_355 = arith.constant 0 : index
    %515 = vector.load %arg5[%c0_352, %c1_353, %c0_354, %c0_355] : memref<1x3x16x128xf32, #tpu.memory_space<vmem>>, vector<1x1x16x128xf32>
    %516 = vector.shape_cast %515 : vector<1x1x16x128xf32> to vector<16x128xf32>
    %517 = vector.shape_cast %514 : vector<16x128xf32> to vector<1x1x16x128xf32>
    tpu.vector_store %arg5[%c0_352, %c1_353, %c0_354, %c0_355], %517 {strides = array<i32>} : memref<1x3x16x128xf32, #tpu.memory_space<vmem>>, vector<1x1x16x128xf32>,
    %c0_356 = arith.constant 0 : index
    %c2_357 = arith.constant 2 : index
    %c0_358 = arith.constant 0 : index
    %c0_359 = arith.constant 0 : index
    %518 = vector.load %arg5[%c0_356, %c2_357, %c0_358, %c0_359] : memref<1x3x16x128xf32, #tpu.memory_space<vmem>>, vector<1x1x16x128xf32>
    %519 = vector.shape_cast %518 : vector<1x1x16x128xf32> to vector<16x128xf32>
    %520 = arith.mulf %519, %505 : vector<16x128xf32>
    %c0_360 = arith.constant 0 : index
    %c2_361 = arith.constant 2 : index
    %c0_362 = arith.constant 0 : index
    %c0_363 = arith.constant 0 : index
    %521 = vector.load %arg5[%c0_360, %c2_361, %c0_362, %c0_363] : memref<1x3x16x128xf32, #tpu.memory_space<vmem>>, vector<1x1x16x128xf32>
    %522 = vector.shape_cast %521 : vector<1x1x16x128xf32> to vector<16x128xf32>
    %523 = vector.shape_cast %520 : vector<16x128xf32> to vector<1x1x16x128xf32>
    tpu.vector_store %arg5[%c0_360, %c2_361, %c0_362, %c0_363], %523 {strides = array<i32>} : memref<1x3x16x128xf32, #tpu.memory_space<vmem>>, vector<1x1x16x128xf32>,
    return
  }
  func.func @transform_0(%arg0: i32, %arg1: memref<2xi32, #tpu.memory_space<smem>>, %arg2: memref<2xf32, #tpu.memory_space<smem>>, %arg3: memref<2xf32, #tpu.memory_space<smem>>) -> (i32, i32, i32, i32) {
    %c0_i32 = arith.constant 0 : i32
    %c0_i32_0 = arith.constant 0 : i32
    %c0_i32_1 = arith.constant 0 : i32
    %c0_i32_2 = arith.constant 0 : i32
    return %arg0, %c0_i32, %c0_i32_0, %c0_i32_1 : i32, i32, i32, i32
  }
  func.func @transform_1(%arg0: i32, %arg1: memref<2xi32, #tpu.memory_space<smem>>, %arg2: memref<2xf32, #tpu.memory_space<smem>>, %arg3: memref<2xf32, #tpu.memory_space<smem>>) -> (i32, i32, i32, i32) {
    %c0_i32 = arith.constant 0 : i32
    %c0_i32_0 = arith.constant 0 : i32
    %c0_i32_1 = arith.constant 0 : i32
    %c0_i32_2 = arith.constant 0 : i32
    return %arg0, %c0_i32, %c0_i32_0, %c0_i32_1 : i32, i32, i32, i32
  }
}

</mosaic_0001>

<llo_original>
// kernel: tpu_custom_call.1
$region0: #{tpu_custom_call.1}
  #allocation0 [shape = 'u32[]', space=smem, size = 0x4, offset = 0x4, fixed_abs, tag = 'smem constant byte address 0x4 - core index']
  #allocation1 [shape = 'u32[144,128]{1,0:T(1,128)}', space=vmem, size = 0x12000, scoped, tag = 'internal scratch']
  #allocation2 [shape = 'f32[16,128]{1,0:T(8,128)}', space=vmem, size = 0x2000, scoped, tag = 'scratch operand']
  #allocation3 [shape = 's32[1]{0}', space=sflag, size = 0x4, scoped, tag = 'scoped memory for tpu_custom_call.1']
  #allocation4 [shape = 'u8[512]{0}', space=smem, size = 0x200, scoped, tag = 'prefetched SMEM operand 0']
  #allocation5 [shape = 'u8[512]{0}', space=smem, size = 0x200, scoped, tag = 'prefetched SMEM operand 1']
  #allocation6 [shape = 'u8[512]{0}', space=smem, size = 0x200, scoped, tag = 'prefetched SMEM operand 2']
  %s0 = inlined_call_operand.hbm [shape: s32[2], index: 0, kind: input, shape index: {}]
  %s1 = inlined_call_operand.vmem [shape: f32[2], index: 1, kind: input, shape index: {}]
  %s2 = inlined_call_operand.vmem [shape: f32[2], index: 2, kind: input, shape index: {}]
  %s3 = inlined_call_operand.hbm [shape: f32[2,3,16,128], index: 3, kind: input, shape index: {}]
  %s4 = inlined_call_operand.hbm [shape: f32[2,3,16,128], index: 4, kind: output, shape index: {}]
  %s5 = sld [smem:[#allocation0]]
  $region41: #{tpu_custom_call.1} parent=0
    _
  %s7 = ssub.s32 1, %s5
  %s8 = scalar_select 0, %s7, %s5
  %10 = dma.hbm_to_smem %s0, 16, [#allocation4], [#allocation3]
  %s11 = sshll.u32 %s1, 4
  %s12 = int_to_ptr.vmem [resolvable:$true] %s11
  %14 = dma.vmem_to_smem %s12, 16, [#allocation5], [#allocation3]
  %s15 = sshll.u32 %s2, 4
  %s16 = int_to_ptr.vmem [resolvable:$true] %s15
  %18 = dma.vmem_to_smem %s16, 16, [#allocation6], [#allocation3]
  %19 = dma.done [#allocation3], 48
  %20 = sfence
  $region1: #{tpu_custom_call.1} parent=0
    #allocation7 [shape = 'u8[49152]{0}', space=vmem, size = 0xc000, scoped, tag = 'input window, operand 3']
    #allocation8 [shape = 's32[2]{0}', space=sflag, size = 0x8, scoped, tag = 'scoped memory for tpu_custom_call.1']
    #allocation9 [shape = 's32[2]{0}', space=sflag, size = 0x8, scoped, tag = 'scoped memory for tpu_custom_call.1']
    #allocation10 [shape = 'u8[49152]{0}', space=vmem, size = 0xc000, scoped, tag = 'output window, operand 0']
    %21 = vsyncpa [#allocation8], 0
    %s22 = scalar_lea.sflag [#allocation8], 1
    %23 = vsyncpa %s22, 0
    %24 = vsyncpa [#allocation9], 0
    %s25 = scalar_lea.sflag [#allocation9], 1
    %26 = vsyncpa %s25, 0
    loop: start=0, step=1, limit=4
    $region2: #{tpu_custom_call.1} parent=1 // loop_pre_header
      _
    $region3: #{tpu_custom_call.1} parent=1 // loop_header
      %s28 = sphi 0, %s32
      %p29 = scmp.ge.s32.totalorder %s28, 4
      %s38 = sphi 0, %s40
      %s41 = sphi 0, %s38
      %s42 = sphi 0, %s41
      %s58 = sphi 0, %s42
      %s64 = sphi 0, %s66
      %s67 = sphi 0, %s64
      %s68 = sphi 0, %s67
      %s84 = sphi 0, %s68
    $region4: #{tpu_custom_call.1} parent=1 // loop_header_branch
      %31 = sbr.rel (%p29) target = $region8
    $region5: #{tpu_custom_call.1} parent=1 // loop_body
      %s33 = ssub.s32 %s28, 1
      %s34 = ssub.s32 %s28, 2
      %s35 = sadd.s32 %s28, 1
      %s36 = ssub.s32 %s28, %s35
      %p37 = scmp.eq.s32.totalorder %s36, 0
      %s39 = sadd.s32 %s38, 1
      %s40 = scalar_select %p37, %s38, %s39
      %p43 = pneg %p37
      %p44 = scmp.eq.s32.totalorder %s28, 1
      %p45 = por %p43, %p44
      %p46 = scmp.ne.s32.totalorder %s38, %s41
      %p47 = scmp.eq.s32.totalorder %s28, 0
      %p48 = por %p46, %p47
      %p49 = scmp.ne.s32.totalorder %s38, %s41
      %p50 = scmp.eq.s32.totalorder %s33, 1
      %p51 = por %p49, %p50
      %p52 = scmp.ne.s32.totalorder %s41, %s42
      %p53 = scmp.eq.s32.totalorder %s33, 0
      %p54 = por %p52, %p53
      %p55 = scmp.ne.s32.totalorder %s41, %s42
      %p56 = scmp.eq.s32.totalorder %s34, 1
      %p57 = por %p55, %p56
      %p59 = scmp.ne.s32.totalorder %s42, %s58
      %p60 = scmp.eq.s32.totalorder %s34, 0
      %p61 = por %p59, %p60
      %s62 = ssub.s32 %s28, %s35
      %p63 = scmp.eq.s32.totalorder %s62, 0
      %s65 = sadd.s32 %s64, 1
      %s66 = scalar_select %p63, %s64, %s65
      %p69 = pneg %p63
      %p70 = scmp.eq.s32.totalorder %s28, 1
      %p71 = por %p69, %p70
      %p72 = scmp.ne.s32.totalorder %s64, %s67
      %p73 = scmp.eq.s32.totalorder %s28, 0
      %p74 = por %p72, %p73
      %p75 = scmp.ne.s32.totalorder %s64, %s67
      %p76 = scmp.eq.s32.totalorder %s33, 1
      %p77 = por %p75, %p76
      %p78 = scmp.ne.s32.totalorder %s67, %s68
      %p79 = scmp.eq.s32.totalorder %s33, 0
      %p80 = por %p78, %p79
      %p81 = scmp.ne.s32.totalorder %s67, %s68
      %p82 = scmp.eq.s32.totalorder %s34, 1
      %p83 = por %p81, %p82
      %p85 = scmp.ne.s32.totalorder %s68, %s84
      %p86 = scmp.eq.s32.totalorder %s34, 0
      %p87 = por %p85, %p86
      %p88 = scmp.le.s32.totalorder 1, %s28
      %p89 = scmp.lt.s32.totalorder %s28, 3
      %p90 = pnand %p88, %p89
      %p91 = pneg %p90
      // Predicated region
      $region9: #{tpu_custom_call.1} parent=5 // pred_check
        _
      $region10: #{tpu_custom_call.1} parent=5 // pred_check_branch
        %93 = sbr.rel (%p90) target = $region12
      $region11: #{tpu_custom_call.1} parent=5 // pred_region
        %s94 = ssub.s32 %s28, 1
      $region12: #{tpu_custom_call.1} parent=5 // pred_fallthru
        _
      %p95 = scmp.lt.s32.totalorder %s28, 2
      // Predicated region
      $region13: #{tpu_custom_call.1} parent=5 // pred_check
        %p96 = pneg %p95
      $region14: #{tpu_custom_call.1} parent=5 // pred_check_branch
        %98 = sbr.rel (%p96) target = $region16
      $region15: #{tpu_custom_call.1} parent=5 // pred_region
        // Predicated region
        $region17: #{tpu_custom_call.1} parent=15 // pred_check
          %p99 = pneg %p48
        $region18: #{tpu_custom_call.1} parent=15 // pred_check_branch
          %101 = sbr.rel (%p99) target = $region20
        $region19: #{tpu_custom_call.1} parent=15 // pred_region
          %s102 = sand.u32 %s38, 1
          %s103 = scalar_lea.sflag [#allocation8], %s102
          %s104 = sand.u32 %s38, 1
          %s105 = smul.addr %s104, 48
          %s106 = scalar_lea.vmem [#allocation7], %s105
          %s108 = ssub.s32 768, 768
          %109 = vsyncadd %s103, %s108
          %s110 = smul.addr %s28, 6
          %s111 = smul.addr %s110, 128
          %s112 = scalar_lea.hbm %s3, %s111
          %s113 = sshll.u32 %s106, 4
          %s114 = int_to_ptr.vmem [resolvable:$true] %s113
          %119 = dma.hbm_to_vmem [thread:$0]  %s112, 768, %s114, %s103, 128, 128, 8
        $region20: #{tpu_custom_call.1} parent=15 // pred_fallthru
          _
      $region16: #{tpu_custom_call.1} parent=5 // pred_fallthru
        _
      %p120 = scmp.le.s32.totalorder 1, %s28
      %p121 = scmp.lt.s32.totalorder %s28, 3
      %p122 = pnand %p120, %p121
      %p123 = pneg %p122
      // Predicated region
      $region21: #{tpu_custom_call.1} parent=5 // pred_check
        _
      $region22: #{tpu_custom_call.1} parent=5 // pred_check_branch
        %125 = sbr.rel (%p122) target = $region24
      $region23: #{tpu_custom_call.1} parent=5 // pred_region
        %s126 = ssub.s32 %s28, 1
        %s127 = sand.u32 %s41, 1
        %s128 = scalar_lea.sflag [#allocation8], %s127
        %s129 = sand.u32 %s41, 1
        %s130 = smul.addr %s129, 48
        %s131 = scalar_lea.vmem [#allocation7], %s130
        // Predicated region
        $region25: #{tpu_custom_call.1} parent=23 // pred_check
          %p132 = pneg %p54
        $region26: #{tpu_custom_call.1} parent=23 // pred_check_branch
          %134 = sbr.rel (%p132) target = $region28
        $region27: #{tpu_custom_call.1} parent=23 // pred_region
          %135 = dma.done %s128, 768
        $region28: #{tpu_custom_call.1} parent=23 // pred_fallthru
          _
        %s136 = sand.u32 %s41, 1
        %s137 = scalar_lea.sflag [#allocation8], %s136
        %s138 = sand.u32 %s41, 1
        %s139 = smul.addr %s138, 48
        %s140 = scalar_lea.vmem [#allocation7], %s139
        %p141 = pneg %p54
        %p142 = pneg %p51
        %p143 = pneg %p80
        %p144 = pneg %p77
        %s145 = sand.u32 %s67, 1
        %s146 = scalar_lea.sflag [#allocation9], %s145
        %s147 = sand.u32 %s67, 1
        %s148 = smul.addr %s147, 48
        %s149 = scalar_lea.vmem [#allocation10], %s148
        %s150 = sld [smem:[#allocation5 + %s33]]
        %s151 = sld [smem:[#allocation6 + %s33]]
        %v152 = vld [vmem:[%s131] sm:$0xff]
        %v153 = vld [vmem:[%s131 + $0x8] sm:$0xff]
        %s154 = scalar_lea.vmem %s131, 16 [#allocation7]
        %v155 = vld [vmem:[%s154] sm:$0xff]
        %v156 = vld [vmem:[%s154 + $0x8] sm:$0xff]
        %s157 = scalar_lea.vmem %s131, 32 [#allocation7]
        %v158 = vld [vmem:[%s157] sm:$0xff]
        %v159 = vld [vmem:[%s157 + $0x8] sm:$0xff]
        %v160 = vlaneseq
        %v161 = vshrl.u32 %v160, 7
        %v162 = vadd.s32 %v161, 8
        %v163 = vlaneseq
        %v164 = vand.u32 %v163, 127
        %v165 = vadd.s32 %v164, 4294967295
        %vm166 = vcmp.ge.s32.totalorder %v165, 0
        %vm167 = vcmp.lt.s32.totalorder %v165, 16
        %vm168 = vmand %vm166, %vm167
        %v169 = vsel %vm168, 1, 0
        %v170 = vcvt.s32.f32 %v169
        %vm171 = vcmp.ge.s32.totalorder %v164, 0
        %vm172 = vcmp.lt.s32.totalorder %v164, 16
        %vm173 = vmand %vm171, %vm172
        %v174 = vsel %vm173, 1, 0
        %v175 = vcvt.s32.f32 %v174
        %v176 = vadd.s32 %v164, 1
        %vm177 = vcmp.ge.s32.totalorder %v176, 0
        %vm178 = vcmp.lt.s32.totalorder %v176, 16
        %vm179 = vmand %vm177, %vm178
        %v180 = vsel %vm179, 1, 0
        %v181 = vcvt.s32.f32 %v180
        %182 = vst [vmem:[#allocation2] sm:$0xff] 0.0
        %183 = vst [vmem:[#allocation2 + $0x8] sm:$0xff] 0.0
        %184 = vst [vmem:[%s149] sm:$0xff] 0.0
        %185 = vst [vmem:[%s149 + $0x8] sm:$0xff] 0.0
        %186 = vst [vmem:[%s149 + $0x10] sm:$0xff] 0.0
        %187 = vst [vmem:[%s149 + $0x18] sm:$0xff] 0.0
        %188 = vst [vmem:[%s149 + $0x20] sm:$0xff] 0.0
        %189 = vst [vmem:[%s149 + $0x28] sm:$0xff] 0.0
        %v190 = vrot.slane %v152, 7
        %v191 = vrot.slane %v153, 7
        %vm192 = vcmp.lt.s32.totalorder %v161, 1
        %v193 = vsel %vm192, %v190, %v191
        %v194 = vsel %vm192, %v191, %v190
        %v195 = vrot.slane %v155, 7
        %v196 = vrot.slane %v156, 7
        %v197 = vsel %vm192, %v195, %v196
        %v198 = vsel %vm192, %v196, %v195
        %v199 = vrot.slane %v158, 7
        %v200 = vrot.slane %v159, 7
        %v201 = vsel %vm192, %v199, %v200
        %v202 = vsel %vm192, %v200, %v199
        %v203 = vadd.s32 %v161, 4294967295
        %v204 = vadd.s32 %v162, 4294967295
        %vm205 = vcmp.ge.s32.totalorder %v203, 0
        %vm206 = vcmp.ge.s32.totalorder %v204, 0
        %vm207 = vcmp.lt.s32.totalorder %v203, 16
        %vm208 = vcmp.lt.s32.totalorder %v204, 16
        %vm209 = vmand %vm205, %vm207
        %vm210 = vmand %vm206, %vm208
        %v211 = vsel %vm209, 1, 0
        %v212 = vsel %vm210, 1, 0
        %v213 = vcvt.s32.f32 %v211
        %v214 = vcvt.s32.f32 %v212
        %215 = vrot.lane.b32.xlu0 %v194, 1
        %v216 = vpop.permute.xlu0 %215
        %217 = vrot.lane.b32.xlu0 %v193, 1
        %v218 = vpop.permute.xlu0 %217
        %219 = vrot.lane.b32.xlu0 %v198, 1
        %v220 = vpop.permute.xlu0 %219
        %221 = vrot.lane.b32.xlu0 %v197, 1
        %v222 = vpop.permute.xlu0 %221
        %223 = vrot.lane.b32.xlu0 %v202, 1
        %v224 = vpop.permute.xlu0 %223
        %225 = vrot.lane.b32.xlu0 %v201, 1
        %v226 = vpop.permute.xlu0 %225
        %v227 = vsub.f32 %v216, %v152
        %v228 = vsub.f32 %v218, %v153
        %v229 = vmul.f32 %v227, %v227
        %v230 = vmul.f32 %v228, %v228
        %v231 = vadd.f32 %v229, 0.0
        %v232 = vadd.f32 %v230, 0.0
        %v233 = vsub.f32 %v220, %v155
        %v234 = vsub.f32 %v222, %v156
        %v235 = vmul.f32 %v233, %v233
        %v236 = vmul.f32 %v234, %v234
        %v237 = vadd.f32 %v231, %v235
        %v238 = vadd.f32 %v232, %v236
        %v239 = vsub.f32 %v224, %v158
        %v240 = vsub.f32 %v226, %v159
        %v241 = vmul.f32 %v239, %v239
        %v242 = vmul.f32 %v240, %v240
        %v243 = vadd.f32 %v237, %v241
        %v244 = vadd.f32 %v238, %v242
        %v245 = vstv %s150
        %v246 = vmul.f32 %v243, %v245
        %v247 = vmul.f32 %v244, %v245
        %s248 = smul.f32 %s151, 2.0
        %v249 = vstv %s248
        %v250 = vadd.f32 %v246, %v249
        %v251 = vadd.f32 %v247, %v249
        %v252 = vsub.f32 0.0, %v250
        %v253 = vsub.f32 0.0, %v251
        %v254 = vmul.f32 %v252, 1.442695
        %v255 = vpow.pop %v254
        %v256 = vmul.f32 %v253, 1.442695
        %v257 = vpow.pop %v256
        %v258 = vmul.f32 %v213, %v170
        %v259 = vmul.f32 %v214, %v170
        %v260 = vmul.f32 %v255, %v258
        %v261 = vmul.f32 %v257, %v259
        %v262 = vld [vmem:[#allocation2] sm:$0xff]
        %v263 = vld [vmem:[#allocation2 + $0x8] sm:$0xff]
        %v264 = vadd.f32 %v262, %v260
        %v265 = vadd.f32 %v263, %v261
        %266 = vst [vmem:[#allocation2] sm:$0xff] %v264
        %267 = vst [vmem:[#allocation2 + $0x8] sm:$0xff] %v265
        %v268 = vld [vmem:[%s149] sm:$0xff]
        %v269 = vld [vmem:[%s149 + $0x8] sm:$0xff]
        %v270 = vmul.f32 %v260, %v216
        %v271 = vmul.f32 %v261, %v218
        %v272 = vadd.f32 %v268, %v270
        %v273 = vadd.f32 %v269, %v271
        %274 = vst [vmem:[%s149] sm:$0xff] %v272
        %275 = vst [vmem:[%s149 + $0x8] sm:$0xff] %v273
        %s276 = scalar_lea.vmem %s149, 16 [#allocation10]
        %v277 = vld [vmem:[%s276] sm:$0xff]
        %v278 = vld [vmem:[%s276 + $0x8] sm:$0xff]
        %v279 = vmul.f32 %v260, %v220
        %v280 = vmul.f32 %v261, %v222
        %v281 = vadd.f32 %v277, %v279
        %v282 = vadd.f32 %v278, %v280
        %283 = vst [vmem:[%s276] sm:$0xff] %v281
        %284 = vst [vmem:[%s276 + $0x8] sm:$0xff] %v282
        %s285 = scalar_lea.vmem %s149, 32 [#allocation10]
        %v286 = vld [vmem:[%s285] sm:$0xff]
        %v287 = vld [vmem:[%s285 + $0x8] sm:$0xff]
        %v288 = vmul.f32 %v260, %v224
        %v289 = vmul.f32 %v261, %v226
        %v290 = vadd.f32 %v286, %v288
        %v291 = vadd.f32 %v287, %v289
        %292 = vst [vmem:[%s285] sm:$0xff] %v290
        %293 = vst [vmem:[%s285 + $0x8] sm:$0xff] %v291
        %v294 = vsub.f32 %v194, %v152
        %v295 = vsub.f32 %v193, %v153
        %v296 = vmul.f32 %v294, %v294
        %v297 = vmul.f32 %v295, %v295
        %v298 = vadd.f32 %v296, 0.0
        %v299 = vadd.f32 %v297, 0.0
        %v300 = vsub.f32 %v198, %v155
        %v301 = vsub.f32 %v197, %v156
        %v302 = vmul.f32 %v300, %v300
        %v303 = vmul.f32 %v301, %v301
        %v304 = vadd.f32 %v298, %v302
        %v305 = vadd.f32 %v299, %v303
        %v306 = vsub.f32 %v202, %v158
        %v307 = vsub.f32 %v201, %v159
        %v308 = vmul.f32 %v306, %v306
        %v309 = vmul.f32 %v307, %v307
        %v310 = vadd.f32 %v304, %v308
        %v311 = vadd.f32 %v305, %v309
        %v312 = vmul.f32 %v310, %v245
        %v313 = vmul.f32 %v311, %v245
        %v314 = vstv %s151
        %v315 = vadd.f32 %v312, %v314
        %v316 = vadd.f32 %v313, %v314
        %v317 = vsub.f32 0.0, %v315
        %v318 = vsub.f32 0.0, %v316
        %v319 = vmul.f32 %v317, 1.442695
        %v320 = vpow.pop %v319
        %v321 = vmul.f32 %v318, 1.442695
        %v322 = vpow.pop %v321
        %v323 = vmul.f32 %v213, %v175
        %v324 = vmul.f32 %v214, %v175
        %v325 = vmul.f32 %v320, %v323
        %v326 = vmul.f32 %v322, %v324
        %v327 = vld [vmem:[#allocation2] sm:$0xff]
        %v328 = vld [vmem:[#allocation2 + $0x8] sm:$0xff]
        %v329 = vadd.f32 %v327, %v325
        %v330 = vadd.f32 %v328, %v326
        %331 = vst [vmem:[#allocation2] sm:$0xff] %v329
        %332 = vst [vmem:[#allocation2 + $0x8] sm:$0xff] %v330
        %v333 = vld [vmem:[%s149] sm:$0xff]
        %v334 = vld [vmem:[%s149 + $0x8] sm:$0xff]
        %v335 = vmul.f32 %v325, %v194
        %v336 = vmul.f32 %v326, %v193
        %v337 = vadd.f32 %v333, %v335
        %v338 = vadd.f32 %v334, %v336
        %339 = vst [vmem:[%s149] sm:$0xff] %v337
        %340 = vst [vmem:[%s149 + $0x8] sm:$0xff] %v338
        %v341 = vld [vmem:[%s276] sm:$0xff]
        %v342 = vld [vmem:[%s276 + $0x8] sm:$0xff]
        %v343 = vmul.f32 %v325, %v198
        %v344 = vmul.f32 %v326, %v197
        %v345 = vadd.f32 %v341, %v343
        %v346 = vadd.f32 %v342, %v344
        %347 = vst [vmem:[%s276] sm:$0xff] %v345
        %348 = vst [vmem:[%s276 + $0x8] sm:$0xff] %v346
        %v349 = vld [vmem:[%s285] sm:$0xff]
        %v350 = vld [vmem:[%s285 + $0x8] sm:$0xff]
        %v351 = vmul.f32 %v325, %v202
        %v352 = vmul.f32 %v326, %v201
        %v353 = vadd.f32 %v349, %v351
        %v354 = vadd.f32 %v350, %v352
        %355 = vst [vmem:[%s285] sm:$0xff] %v353
        %356 = vst [vmem:[%s285 + $0x8] sm:$0xff] %v354
        %357 = vrot.lane.b32.xlu0 %v194, 127
        %v358 = vpop.permute.xlu0 %357
        %359 = vrot.lane.b32.xlu0 %v193, 127
        %v360 = vpop.permute.xlu0 %359
        %361 = vrot.lane.b32.xlu0 %v198, 127
        %v362 = vpop.permute.xlu0 %361
        %363 = vrot.lane.b32.xlu0 %v197, 127
        %v364 = vpop.permute.xlu0 %363
        %365 = vrot.lane.b32.xlu0 %v202, 127
        %v366 = vpop.permute.xlu0 %365
        %367 = vrot.lane.b32.xlu0 %v201, 127
        %v368 = vpop.permute.xlu0 %367
        %v369 = vsub.f32 %v358, %v152
        %v370 = vsub.f32 %v360, %v153
        %v371 = vmul.f32 %v369, %v369
        %v372 = vmul.f32 %v370, %v370
        %v373 = vadd.f32 %v371, 0.0
        %v374 = vadd.f32 %v372, 0.0
        %v375 = vsub.f32 %v362, %v155
        %v376 = vsub.f32 %v364, %v156
        %v377 = vmul.f32 %v375, %v375
        %v378 = vmul.f32 %v376, %v376
        %v379 = vadd.f32 %v373, %v377
        %v380 = vadd.f32 %v374, %v378
        %v381 = vsub.f32 %v366, %v158
        %v382 = vsub.f32 %v368, %v159
        %v383 = vmul.f32 %v381, %v381
        %v384 = vmul.f32 %v382, %v382
        %v385 = vadd.f32 %v379, %v383
        %v386 = vadd.f32 %v380, %v384
        %v387 = vmul.f32 %v385, %v245
        %v388 = vmul.f32 %v386, %v245
        %v389 = vadd.f32 %v387, %v249
        %v390 = vadd.f32 %v388, %v249
        %v391 = vsub.f32 0.0, %v389
        %v392 = vsub.f32 0.0, %v390
        %v393 = vmul.f32 %v391, 1.442695
        %v394 = vpow.pop %v393
        %v395 = vmul.f32 %v392, 1.442695
        %v396 = vpow.pop %v395
        %v397 = vmul.f32 %v213, %v181
        %v398 = vmul.f32 %v214, %v181
        %v399 = vmul.f32 %v394, %v397
        %v400 = vmul.f32 %v396, %v398
        %v401 = vld [vmem:[#allocation2] sm:$0xff]
        %v402 = vld [vmem:[#allocation2 + $0x8] sm:$0xff]
        %v403 = vadd.f32 %v401, %v399
        %v404 = vadd.f32 %v402, %v400
        %405 = vst [vmem:[#allocation2] sm:$0xff] %v403
        %406 = vst [vmem:[#allocation2 + $0x8] sm:$0xff] %v404
        %v407 = vld [vmem:[%s149] sm:$0xff]
        %v408 = vld [vmem:[%s149 + $0x8] sm:$0xff]
        %v409 = vmul.f32 %v399, %v358
        %v410 = vmul.f32 %v400, %v360
        %v411 = vadd.f32 %v407, %v409
        %v412 = vadd.f32 %v408, %v410
        %413 = vst [vmem:[%s149] sm:$0xff] %v411
        %414 = vst [vmem:[%s149 + $0x8] sm:$0xff] %v412
        %v415 = vld [vmem:[%s276] sm:$0xff]
        %v416 = vld [vmem:[%s276 + $0x8] sm:$0xff]
        %v417 = vmul.f32 %v399, %v362
        %v418 = vmul.f32 %v400, %v364
        %v419 = vadd.f32 %v415, %v417
        %v420 = vadd.f32 %v416, %v418
        %421 = vst [vmem:[%s276] sm:$0xff] %v419
        %422 = vst [vmem:[%s276 + $0x8] sm:$0xff] %v420
        %v423 = vld [vmem:[%s285] sm:$0xff]
        %v424 = vld [vmem:[%s285 + $0x8] sm:$0xff]
        %v425 = vmul.f32 %v399, %v366
        %v426 = vmul.f32 %v400, %v368
        %v427 = vadd.f32 %v423, %v425
        %v428 = vadd.f32 %v424, %v426
        %429 = vst [vmem:[%s285] sm:$0xff] %v427
        %430 = vst [vmem:[%s285 + $0x8] sm:$0xff] %v428
        %vm431 = vcmp.ge.s32.totalorder %v161, 0
        %vm432 = vcmp.ge.s32.totalorder %v162, 0
        %vm433 = vcmp.lt.s32.totalorder %v161, 16
        %vm434 = vcmp.lt.s32.totalorder %v162, 16
        %vm435 = vmand %vm431, %vm433
        %vm436 = vmand %vm432, %vm434
        %v437 = vsel %vm435, 1, 0
        %v438 = vsel %vm436, 1, 0
        %v439 = vcvt.s32.f32 %v437
        %v440 = vcvt.s32.f32 %v438
        %441 = vrot.lane.b32.xlu0 %v152, 1
        %v442 = vpop.permute.xlu0 %441
        %443 = vrot.lane.b32.xlu0 %v153, 1
        %v444 = vpop.permute.xlu0 %443
        %445 = vrot.lane.b32.xlu0 %v155, 1
        %v446 = vpop.permute.xlu0 %445
        %447 = vrot.lane.b32.xlu0 %v156, 1
        %v448 = vpop.permute.xlu0 %447
        %449 = vrot.lane.b32.xlu0 %v158, 1
        %v450 = vpop.permute.xlu0 %449
        %451 = vrot.lane.b32.xlu0 %v159, 1
        %v452 = vpop.permute.xlu0 %451
        %v453 = vsub.f32 %v442, %v152
        %v454 = vsub.f32 %v444, %v153
        %v455 = vmul.f32 %v453, %v453
        %v456 = vmul.f32 %v454, %v454
        %v457 = vadd.f32 %v455, 0.0
        %v458 = vadd.f32 %v456, 0.0
        %v459 = vsub.f32 %v446, %v155
        %v460 = vsub.f32 %v448, %v156
        %v461 = vmul.f32 %v459, %v459
        %v462 = vmul.f32 %v460, %v460
        %v463 = vadd.f32 %v457, %v461
        %v464 = vadd.f32 %v458, %v462
        %v465 = vsub.f32 %v450, %v158
        %v466 = vsub.f32 %v452, %v159
        %v467 = vmul.f32 %v465, %v465
        %v468 = vmul.f32 %v466, %v466
        %v469 = vadd.f32 %v463, %v467
        %v470 = vadd.f32 %v464, %v468
        %v471 = vmul.f32 %v469, %v245
        %v472 = vmul.f32 %v470, %v245
        %v473 = vadd.f32 %v471, %v314
        %v474 = vadd.f32 %v472, %v314
        %v475 = vsub.f32 0.0, %v473
        %v476 = vsub.f32 0.0, %v474
        %v477 = vmul.f32 %v475, 1.442695
        %v478 = vpow.pop %v477
        %v479 = vmul.f32 %v476, 1.442695
        %v480 = vpow.pop %v479
        %v481 = vmul.f32 %v439, %v170
        %v482 = vmul.f32 %v440, %v170
        %v483 = vmul.f32 %v478, %v481
        %v484 = vmul.f32 %v480, %v482
        %v485 = vld [vmem:[#allocation2] sm:$0xff]
        %v486 = vld [vmem:[#allocation2 + $0x8] sm:$0xff]
        %v487 = vadd.f32 %v485, %v483
        %v488 = vadd.f32 %v486, %v484
        %489 = vst [vmem:[#allocation2] sm:$0xff] %v487
        %490 = vst [vmem:[#allocation2 + $0x8] sm:$0xff] %v488
        %v491 = vld [vmem:[%s149] sm:$0xff]
        %v492 = vld [vmem:[%s149 + $0x8] sm:$0xff]
        %v493 = vmul.f32 %v483, %v442
        %v494 = vmul.f32 %v484, %v444
        %v495 = vadd.f32 %v491, %v493
        %v496 = vadd.f32 %v492, %v494
        %497 = vst [vmem:[%s149] sm:$0xff] %v495
        %498 = vst [vmem:[%s149 + $0x8] sm:$0xff] %v496
        %v499 = vld [vmem:[%s276] sm:$0xff]
        %v500 = vld [vmem:[%s276 + $0x8] sm:$0xff]
        %v501 = vmul.f32 %v483, %v446
        %v502 = vmul.f32 %v484, %v448
        %v503 = vadd.f32 %v499, %v501
        %v504 = vadd.f32 %v500, %v502
        %505 = vst [vmem:[%s276] sm:$0xff] %v503
        %506 = vst [vmem:[%s276 + $0x8] sm:$0xff] %v504
        %v507 = vld [vmem:[%s285] sm:$0xff]
        %v508 = vld [vmem:[%s285 + $0x8] sm:$0xff]
        %v509 = vmul.f32 %v483, %v450
        %v510 = vmul.f32 %v484, %v452
        %v511 = vadd.f32 %v507, %v509
        %v512 = vadd.f32 %v508, %v510
        %513 = vst [vmem:[%s285] sm:$0xff] %v511
        %514 = vst [vmem:[%s285 + $0x8] sm:$0xff] %v512
        %v515 = vsub.f32 %v152, %v152
        %v516 = vsub.f32 %v153, %v153
        %v517 = vmul.f32 %v515, %v515
        %v518 = vmul.f32 %v516, %v516
        %v519 = vadd.f32 %v517, 0.0
        %v520 = vadd.f32 %v518, 0.0
        %v521 = vsub.f32 %v155, %v155
        %v522 = vsub.f32 %v156, %v156
        %v523 = vmul.f32 %v521, %v521
        %v524 = vmul.f32 %v522, %v522
        %v525 = vadd.f32 %v519, %v523
        %v526 = vadd.f32 %v520, %v524
        %v527 = vsub.f32 %v158, %v158
        %v528 = vsub.f32 %v159, %v159
        %v529 = vmul.f32 %v527, %v527
        %v530 = vmul.f32 %v528, %v528
        %v531 = vadd.f32 %v525, %v529
        %v532 = vadd.f32 %v526, %v530
        %v533 = vmul.f32 %v531, %v245
        %v534 = vmul.f32 %v532, %v245
        %s535 = smul.f32 %s151, 0.0
        %v536 = vstv %s535
        %v537 = vadd.f32 %v533, %v536
        %v538 = vadd.f32 %v534, %v536
        %v539 = vsub.f32 0.0, %v537
        %v540 = vsub.f32 0.0, %v538
        %v541 = vmul.f32 %v539, 1.442695
        %v542 = vpow.pop %v541
        %v543 = vmul.f32 %v540, 1.442695
        %v544 = vpow.pop %v543
        %v545 = vmul.f32 %v439, %v175
        %v546 = vmul.f32 %v440, %v175
        %v547 = vmul.f32 %v542, %v545
        %v548 = vmul.f32 %v544, %v546
        %v549 = vld [vmem:[#allocation2] sm:$0xff]
        %v550 = vld [vmem:[#allocation2 + $0x8] sm:$0xff]
        %v551 = vadd.f32 %v549, %v547
        %v552 = vadd.f32 %v550, %v548
        %553 = vst [vmem:[#allocation2] sm:$0xff] %v551
        %554 = vst [vmem:[#allocation2 + $0x8] sm:$0xff] %v552
        %v555 = vld [vmem:[%s149] sm:$0xff]
        %v556 = vld [vmem:[%s149 + $0x8] sm:$0xff]
        %v557 = vmul.f32 %v547, %v152
        %v558 = vmul.f32 %v548, %v153
        %v559 = vadd.f32 %v555, %v557
        %v560 = vadd.f32 %v556, %v558
        %561 = vst [vmem:[%s149] sm:$0xff] %v559
        %562 = vst [vmem:[%s149 + $0x8] sm:$0xff] %v560
        %v563 = vld [vmem:[%s276] sm:$0xff]
        %v564 = vld [vmem:[%s276 + $0x8] sm:$0xff]
        %v565 = vmul.f32 %v547, %v155
        %v566 = vmul.f32 %v548, %v156
        %v567 = vadd.f32 %v563, %v565
        %v568 = vadd.f32 %v564, %v566
        %569 = vst [vmem:[%s276] sm:$0xff] %v567
        %570 = vst [vmem:[%s276 + $0x8] sm:$0xff] %v568
        %v571 = vld [vmem:[%s285] sm:$0xff]
        %v572 = vld [vmem:[%s285 + $0x8] sm:$0xff]
        %v573 = vmul.f32 %v547, %v158
        %v574 = vmul.f32 %v548, %v159
        %v575 = vadd.f32 %v571, %v573
        %v576 = vadd.f32 %v572, %v574
        %577 = vst [vmem:[%s285] sm:$0xff] %v575
        %578 = vst [vmem:[%s285 + $0x8] sm:$0xff] %v576
        %579 = vrot.lane.b32.xlu0 %v152, 127
        %v580 = vpop.permute.xlu0 %579
        %581 = vrot.lane.b32.xlu0 %v153, 127
        %v582 = vpop.permute.xlu0 %581
        %583 = vrot.lane.b32.xlu0 %v155, 127
        %v584 = vpop.permute.xlu0 %583
        %585 = vrot.lane.b32.xlu0 %v156, 127
        %v586 = vpop.permute.xlu0 %585
        %587 = vrot.lane.b32.xlu0 %v158, 127
        %v588 = vpop.permute.xlu0 %587
        %589 = vrot.lane.b32.xlu0 %v159, 127
        %v590 = vpop.permute.xlu0 %589
        %v591 = vsub.f32 %v580, %v152
        %v592 = vsub.f32 %v582, %v153
        %v593 = vmul.f32 %v591, %v591
        %v594 = vmul.f32 %v592, %v592
        %v595 = vadd.f32 %v593, 0.0
        %v596 = vadd.f32 %v594, 0.0
        %v597 = vsub.f32 %v584, %v155
        %v598 = vsub.f32 %v586, %v156
        %v599 = vmul.f32 %v597, %v597
        %v600 = vmul.f32 %v598, %v598
        %v601 = vadd.f32 %v595, %v599
        %v602 = vadd.f32 %v596, %v600
        %v603 = vsub.f32 %v588, %v158
        %v604 = vsub.f32 %v590, %v159
        %v605 = vmul.f32 %v603, %v603
        %v606 = vmul.f32 %v604, %v604
        %v607 = vadd.f32 %v601, %v605
        %v608 = vadd.f32 %v602, %v606
        %v609 = vmul.f32 %v607, %v245
        %v610 = vmul.f32 %v608, %v245
        %v611 = vadd.f32 %v609, %v314
        %v612 = vadd.f32 %v610, %v314
        %v613 = vsub.f32 0.0, %v611
        %v614 = vsub.f32 0.0, %v612
        %v615 = vmul.f32 %v613, 1.442695
        %v616 = vpow.pop %v615
        %v617 = vmul.f32 %v614, 1.442695
        %v618 = vpow.pop %v617
        %v619 = vmul.f32 %v439, %v181
        %v620 = vmul.f32 %v440, %v181
        %v621 = vmul.f32 %v616, %v619
        %v622 = vmul.f32 %v618, %v620
        %v623 = vld [vmem:[#allocation2] sm:$0xff]
        %v624 = vld [vmem:[#allocation2 + $0x8] sm:$0xff]
        %v625 = vadd.f32 %v623, %v621
        %v626 = vadd.f32 %v624, %v622
        %627 = vst [vmem:[#allocation2] sm:$0xff] %v625
        %628 = vst [vmem:[#allocation2 + $0x8] sm:$0xff] %v626
        %v629 = vld [vmem:[%s149] sm:$0xff]
        %v630 = vld [vmem:[%s149 + $0x8] sm:$0xff]
        %v631 = vmul.f32 %v621, %v580
        %v632 = vmul.f32 %v622, %v582
        %v633 = vadd.f32 %v629, %v631
        %v634 = vadd.f32 %v630, %v632
        %635 = vst [vmem:[%s149] sm:$0xff] %v633
        %636 = vst [vmem:[%s149 + $0x8] sm:$0xff] %v634
        %v637 = vld [vmem:[%s276] sm:$0xff]
        %v638 = vld [vmem:[%s276 + $0x8] sm:$0xff]
        %v639 = vmul.f32 %v621, %v584
        %v640 = vmul.f32 %v622, %v586
        %v641 = vadd.f32 %v637, %v639
        %v642 = vadd.f32 %v638, %v640
        %643 = vst [vmem:[%s276] sm:$0xff] %v641
        %644 = vst [vmem:[%s276 + $0x8] sm:$0xff] %v642
        %v645 = vld [vmem:[%s285] sm:$0xff]
        %v646 = vld [vmem:[%s285 + $0x8] sm:$0xff]
        %v647 = vmul.f32 %v621, %v588
        %v648 = vmul.f32 %v622, %v590
        %v649 = vadd.f32 %v645, %v647
        %v650 = vadd.f32 %v646, %v648
        %651 = vst [vmem:[%s285] sm:$0xff] %v649
        %652 = vst [vmem:[%s285 + $0x8] sm:$0xff] %v650
        %v653 = vrot.slane %v152, 1
        %v654 = vrot.slane %v153, 1
        %vm655 = vcmp.lt.s32.totalorder %v161, 7
        %v656 = vsel %vm655, %v653, %v654
        %v657 = vsel %vm655, %v654, %v653
        %v658 = vrot.slane %v155, 1
        %v659 = vrot.slane %v156, 1
        %v660 = vsel %vm655, %v658, %v659
        %v661 = vsel %vm655, %v659, %v658
        %v662 = vrot.slane %v158, 1
        %v663 = vrot.slane %v159, 1
        %v664 = vsel %vm655, %v662, %v663
        %v665 = vsel %vm655, %v663, %v662
        %v666 = vadd.s32 %v161, 1
        %v667 = vadd.s32 %v162, 1
        %vm668 = vcmp.ge.s32.totalorder %v666, 0
        %vm669 = vcmp.ge.s32.totalorder %v667, 0
        %vm670 = vcmp.lt.s32.totalorder %v666, 16
        %vm671 = vcmp.lt.s32.totalorder %v667, 16
        %vm672 = vmand %vm668, %vm670
        %vm673 = vmand %vm669, %vm671
        %v674 = vsel %vm672, 1, 0
        %v675 = vsel %vm673, 1, 0
        %v676 = vcvt.s32.f32 %v674
        %v677 = vcvt.s32.f32 %v675
        %678 = vrot.lane.b32.xlu0 %v656, 1
        %v679 = vpop.permute.xlu0 %678
        %680 = vrot.lane.b32.xlu0 %v657, 1
        %v681 = vpop.permute.xlu0 %680
        %682 = vrot.lane.b32.xlu0 %v660, 1
        %v683 = vpop.permute.xlu0 %682
        %684 = vrot.lane.b32.xlu0 %v661, 1
        %v685 = vpop.permute.xlu0 %684
        %686 = vrot.lane.b32.xlu0 %v664, 1
        %v687 = vpop.permute.xlu0 %686
        %688 = vrot.lane.b32.xlu0 %v665, 1
        %v689 = vpop.permute.xlu0 %688
        %v690 = vsub.f32 %v679, %v152
        %v691 = vsub.f32 %v681, %v153
        %v692 = vmul.f32 %v690, %v690
        %v693 = vmul.f32 %v691, %v691
        %v694 = vadd.f32 %v692, 0.0
        %v695 = vadd.f32 %v693, 0.0
        %v696 = vsub.f32 %v683, %v155
        %v697 = vsub.f32 %v685, %v156
        %v698 = vmul.f32 %v696, %v696
        %v699 = vmul.f32 %v697, %v697
        %v700 = vadd.f32 %v694, %v698
        %v701 = vadd.f32 %v695, %v699
        %v702 = vsub.f32 %v687, %v158
        %v703 = vsub.f32 %v689, %v159
        %v704 = vmul.f32 %v702, %v702
        %v705 = vmul.f32 %v703, %v703
        %v706 = vadd.f32 %v700, %v704
        %v707 = vadd.f32 %v701, %v705
        %v708 = vmul.f32 %v706, %v245
        %v709 = vmul.f32 %v707, %v245
        %v710 = vadd.f32 %v708, %v249
        %v711 = vadd.f32 %v709, %v249
        %v712 = vsub.f32 0.0, %v710
        %v713 = vsub.f32 0.0, %v711
        %v714 = vmul.f32 %v712, 1.442695
        %v715 = vpow.pop %v714
        %v716 = vmul.f32 %v713, 1.442695
        %v717 = vpow.pop %v716
        %v718 = vmul.f32 %v676, %v170
        %v719 = vmul.f32 %v677, %v170
        %v720 = vmul.f32 %v715, %v718
        %v721 = vmul.f32 %v717, %v719
        %v722 = vld [vmem:[#allocation2] sm:$0xff]
        %v723 = vld [vmem:[#allocation2 + $0x8] sm:$0xff]
        %v724 = vadd.f32 %v722, %v720
        %v725 = vadd.f32 %v723, %v721
        %726 = vst [vmem:[#allocation2] sm:$0xff] %v724
        %727 = vst [vmem:[#allocation2 + $0x8] sm:$0xff] %v725
        %v728 = vld [vmem:[%s149] sm:$0xff]
        %v729 = vld [vmem:[%s149 + $0x8] sm:$0xff]
        %v730 = vmul.f32 %v720, %v679
        %v731 = vmul.f32 %v721, %v681
        %v732 = vadd.f32 %v728, %v730
        %v733 = vadd.f32 %v729, %v731
        %734 = vst [vmem:[%s149] sm:$0xff] %v732
        %735 = vst [vmem:[%s149 + $0x8] sm:$0xff] %v733
        %v736 = vld [vmem:[%s276] sm:$0xff]
        %v737 = vld [vmem:[%s276 + $0x8] sm:$0xff]
        %v738 = vmul.f32 %v720, %v683
        %v739 = vmul.f32 %v721, %v685
        %v740 = vadd.f32 %v736, %v738
        %v741 = vadd.f32 %v737, %v739
        %742 = vst [vmem:[%s276] sm:$0xff] %v740
        %743 = vst [vmem:[%s276 + $0x8] sm:$0xff] %v741
        %v744 = vld [vmem:[%s285] sm:$0xff]
        %v745 = vld [vmem:[%s285 + $0x8] sm:$0xff]
        %v746 = vmul.f32 %v720, %v687
        %v747 = vmul.f32 %v721, %v689
        %v748 = vadd.f32 %v744, %v746
        %v749 = vadd.f32 %v745, %v747
        %750 = vst [vmem:[%s285] sm:$0xff] %v748
        %751 = vst [vmem:[%s285 + $0x8] sm:$0xff] %v749
        %v752 = vsub.f32 %v656, %v152
        %v753 = vsub.f32 %v657, %v153
        %v754 = vmul.f32 %v752, %v752
        %v755 = vmul.f32 %v753, %v753
        %v756 = vadd.f32 %v754, 0.0
        %v757 = vadd.f32 %v755, 0.0
        %v758 = vsub.f32 %v660, %v155
        %v759 = vsub.f32 %v661, %v156
        %v760 = vmul.f32 %v758, %v758
        %v761 = vmul.f32 %v759, %v759
        %v762 = vadd.f32 %v756, %v760
        %v763 = vadd.f32 %v757, %v761
        %v764 = vsub.f32 %v664, %v158
        %v765 = vsub.f32 %v665, %v159
        %v766 = vmul.f32 %v764, %v764
        %v767 = vmul.f32 %v765, %v765
        %v768 = vadd.f32 %v762, %v766
        %v769 = vadd.f32 %v763, %v767
        %v770 = vmul.f32 %v768, %v245
        %v771 = vmul.f32 %v769, %v245
        %v772 = vadd.f32 %v770, %v314
        %v773 = vadd.f32 %v771, %v314
        %v774 = vsub.f32 0.0, %v772
        %v775 = vsub.f32 0.0, %v773
        %v776 = vmul.f32 %v774, 1.442695
        %v777 = vpow.pop %v776
        %v778 = vmul.f32 %v775, 1.442695
        %v779 = vpow.pop %v778
        %v780 = vmul.f32 %v676, %v175
        %v781 = vmul.f32 %v677, %v175
        %v782 = vmul.f32 %v777, %v780
        %v783 = vmul.f32 %v779, %v781
        %v784 = vld [vmem:[#allocation2] sm:$0xff]
        %v785 = vld [vmem:[#allocation2 + $0x8] sm:$0xff]
        %v786 = vadd.f32 %v784, %v782
        %v787 = vadd.f32 %v785, %v783
        %788 = vst [vmem:[#allocation2] sm:$0xff] %v786
        %789 = vst [vmem:[#allocation2 + $0x8] sm:$0xff] %v787
        %v790 = vld [vmem:[%s149] sm:$0xff]
        %v791 = vld [vmem:[%s149 + $0x8] sm:$0xff]
        %v792 = vmul.f32 %v782, %v656
        %v793 = vmul.f32 %v783, %v657
        %v794 = vadd.f32 %v790, %v792
        %v795 = vadd.f32 %v791, %v793
        %796 = vst [vmem:[%s149] sm:$0xff] %v794
        %797 = vst [vmem:[%s149 + $0x8] sm:$0xff] %v795
        %v798 = vld [vmem:[%s276] sm:$0xff]
        %v799 = vld [vmem:[%s276 + $0x8] sm:$0xff]
        %v800 = vmul.f32 %v782, %v660
        %v801 = vmul.f32 %v783, %v661
        %v802 = vadd.f32 %v798, %v800
        %v803 = vadd.f32 %v799, %v801
        %804 = vst [vmem:[%s276] sm:$0xff] %v802
        %805 = vst [vmem:[%s276 + $0x8] sm:$0xff] %v803
        %v806 = vld [vmem:[%s285] sm:$0xff]
        %v807 = vld [vmem:[%s285 + $0x8] sm:$0xff]
        %v808 = vmul.f32 %v782, %v664
        %v809 = vmul.f32 %v783, %v665
        %v810 = vadd.f32 %v806, %v808
        %v811 = vadd.f32 %v807, %v809
        %812 = vst [vmem:[%s285] sm:$0xff] %v810
        %813 = vst [vmem:[%s285 + $0x8] sm:$0xff] %v811
        %814 = vrot.lane.b32.xlu0 %v656, 127
        %v815 = vpop.permute.xlu0 %814
        %816 = vrot.lane.b32.xlu0 %v657, 127
        %v817 = vpop.permute.xlu0 %816
        %818 = vrot.lane.b32.xlu0 %v660, 127
        %v819 = vpop.permute.xlu0 %818
        %820 = vrot.lane.b32.xlu0 %v661, 127
        %v821 = vpop.permute.xlu0 %820
        %822 = vrot.lane.b32.xlu0 %v664, 127
        %v823 = vpop.permute.xlu0 %822
        %824 = vrot.lane.b32.xlu0 %v665, 127
        %v825 = vpop.permute.xlu0 %824
        %v826 = vsub.f32 %v815, %v152
        %v827 = vsub.f32 %v817, %v153
        %v828 = vmul.f32 %v826, %v826
        %v829 = vmul.f32 %v827, %v827
        %v830 = vadd.f32 %v828, 0.0
        %v831 = vadd.f32 %v829, 0.0
        %v832 = vsub.f32 %v819, %v155
        %v833 = vsub.f32 %v821, %v156
        %v834 = vmul.f32 %v832, %v832
        %v835 = vmul.f32 %v833, %v833
        %v836 = vadd.f32 %v830, %v834
        %v837 = vadd.f32 %v831, %v835
        %v838 = vsub.f32 %v823, %v158
        %v839 = vsub.f32 %v825, %v159
        %v840 = vmul.f32 %v838, %v838
        %v841 = vmul.f32 %v839, %v839
        %v842 = vadd.f32 %v836, %v840
        %v843 = vadd.f32 %v837, %v841
        %v844 = vmul.f32 %v842, %v245
        %v845 = vmul.f32 %v843, %v245
        %v846 = vadd.f32 %v844, %v249
        %v847 = vadd.f32 %v845, %v249
        %v848 = vsub.f32 0.0, %v846
        %v849 = vsub.f32 0.0, %v847
        %v850 = vmul.f32 %v848, 1.442695
        %v851 = vpow.pop %v850
        %v852 = vmul.f32 %v849, 1.442695
        %v853 = vpow.pop %v852
        %v854 = vmul.f32 %v676, %v181
        %v855 = vmul.f32 %v677, %v181
        %v856 = vmul.f32 %v851, %v854
        %v857 = vmul.f32 %v853, %v855
        %v858 = vld [vmem:[#allocation2] sm:$0xff]
        %v859 = vld [vmem:[#allocation2 + $0x8] sm:$0xff]
        %v860 = vadd.f32 %v858, %v856
        %v861 = vadd.f32 %v859, %v857
        %862 = vst [vmem:[#allocation2] sm:$0xff] %v860
        %863 = vst [vmem:[#allocation2 + $0x8] sm:$0xff] %v861
        %v864 = vld [vmem:[%s149] sm:$0xff]
        %v865 = vld [vmem:[%s149 + $0x8] sm:$0xff]
        %v866 = vmul.f32 %v856, %v815
        %v867 = vmul.f32 %v857, %v817
        %v868 = vadd.f32 %v864, %v866
        %v869 = vadd.f32 %v865, %v867
        %870 = vst [vmem:[%s149] sm:$0xff] %v868
        %871 = vst [vmem:[%s149 + $0x8] sm:$0xff] %v869
        %v872 = vld [vmem:[%s276] sm:$0xff]
        %v873 = vld [vmem:[%s276 + $0x8] sm:$0xff]
        %v874 = vmul.f32 %v856, %v819
        %v875 = vmul.f32 %v857, %v821
        %v876 = vadd.f32 %v872, %v874
        %v877 = vadd.f32 %v873, %v875
        %878 = vst [vmem:[%s276] sm:$0xff] %v876
        %879 = vst [vmem:[%s276 + $0x8] sm:$0xff] %v877
        %v880 = vld [vmem:[%s285] sm:$0xff]
        %v881 = vld [vmem:[%s285 + $0x8] sm:$0xff]
        %v882 = vmul.f32 %v856, %v823
        %v883 = vmul.f32 %v857, %v825
        %v884 = vadd.f32 %v880, %v882
        %v885 = vadd.f32 %v881, %v883
        %886 = vst [vmem:[%s285] sm:$0xff] %v884
        %887 = vst [vmem:[%s285 + $0x8] sm:$0xff] %v885
        %v888 = vld [vmem:[#allocation2] sm:$0xff]
        %v889 = vld [vmem:[#allocation2 + $0x8] sm:$0xff]
        %v890 = vmax.f32 %v888, 1e-06
        %v891 = vmax.f32 %v889, 1e-06
        %v892 = vrcp.pop %v890
        %v893 = vrcp.pop %v891
        %v894 = vld [vmem:[%s149] sm:$0xff]
        %v895 = vld [vmem:[%s149 + $0x8] sm:$0xff]
        %v896 = vmul.f32 %v894, %v892
        %v897 = vmul.f32 %v895, %v893
        %898 = vst [vmem:[%s149] sm:$0xff] %v896
        %899 = vst [vmem:[%s149 + $0x8] sm:$0xff] %v897
        %v900 = vld [vmem:[%s276] sm:$0xff]
        %v901 = vld [vmem:[%s276 + $0x8] sm:$0xff]
        %v902 = vmul.f32 %v900, %v892
        %v903 = vmul.f32 %v901, %v893
        %904 = vst [vmem:[%s276] sm:$0xff] %v902
        %905 = vst [vmem:[%s276 + $0x8] sm:$0xff] %v903
        %v906 = vld [vmem:[%s285] sm:$0xff]
        %v907 = vld [vmem:[%s285 + $0x8] sm:$0xff]
        %v908 = vmul.f32 %v906, %v892
        %v909 = vmul.f32 %v907, %v893
        %910 = vst [vmem:[%s285] sm:$0xff] %v908
        %911 = vst [vmem:[%s285 + $0x8] sm:$0xff] %v909
        %s912 = sand.u32 %s67, 1
        %s913 = scalar_lea.sflag [#allocation9], %s912
        %s914 = sand.u32 %s67, 1
        %s915 = smul.addr %s914, 48
        %s916 = scalar_lea.vmem [#allocation10], %s915
        // Predicated region
        $region29: #{tpu_custom_call.1} parent=23 // pred_check
          %p917 = pneg %p77
        $region30: #{tpu_custom_call.1} parent=23 // pred_check_branch
          %919 = sbr.rel (%p917) target = $region32
        $region31: #{tpu_custom_call.1} parent=23 // pred_region
          %s921 = ssub.s32 768, 768
          %922 = vsyncadd %s913, %s921
          %s923 = smul.addr %s33, 6
          %s924 = smul.addr %s923, 128
          %s925 = scalar_lea.hbm %s4, %s924
          %s926 = sshll.u32 %s916, 4
          %s927 = int_to_ptr.vmem [resolvable:$true] %s926
          %932 = dma.vmem_to_hbm [thread:$0]  %s927, 768, %s925, %s913, 128, 128, 8
        $region32: #{tpu_custom_call.1} parent=23 // pred_fallthru
          _
      $region24: #{tpu_custom_call.1} parent=5 // pred_fallthru
        _
      %p933 = scmp.le.s32.totalorder 2, %s28
      // Predicated region
      $region33: #{tpu_custom_call.1} parent=5 // pred_check
        %p934 = pneg %p933
      $region34: #{tpu_custom_call.1} parent=5 // pred_check_branch
        %936 = sbr.rel (%p934) target = $region36
      $region35: #{tpu_custom_call.1} parent=5 // pred_region
        %s937 = ssub.s32 %s28, 2
        // Predicated region
        $region37: #{tpu_custom_call.1} parent=35 // pred_check
          %p938 = pneg %p83
        $region38: #{tpu_custom_call.1} parent=35 // pred_check_branch
          %940 = sbr.rel (%p938) target = $region40
        $region39: #{tpu_custom_call.1} parent=35 // pred_region
          %s941 = sand.u32 %s68, 1
          %s942 = scalar_lea.sflag [#allocation9], %s941
          %s943 = sand.u32 %s68, 1
          %s944 = smul.addr %s943, 48
          %s945 = scalar_lea.vmem [#allocation10], %s944
          %946 = dma.done %s942, 768
        $region40: #{tpu_custom_call.1} parent=35 // pred_fallthru
          _
      $region36: #{tpu_custom_call.1} parent=5 // pred_fallthru
        _
    $region6: #{tpu_custom_call.1} parent=1 // loop_footer
      %s32 = sadd.s32 1, %s28
    $region7: #{tpu_custom_call.1} parent=1 // loop_footer_branch
      %27 = sbr.rel target = $region3
    $region8: #{tpu_custom_call.1} parent=1 // loop_exit
      _
    %947 = vsyncpa [#allocation8], 1
    %s948 = scalar_lea.sflag [#allocation8], 1
    %949 = vsyncpa %s948, 1
    %950 = vsyncpa [#allocation9], 1
    %s951 = scalar_lea.sflag [#allocation9], 1
    %952 = vsyncpa %s951, 1

</llo_original>
